<compile_context>
chip_gen: v6e
topology: v6e:2x2x1
jax: 0.10.0
libtpu: 0.0.40
codegen_flags: <defaults>
</compile_context>

<pallas_src>
import math

import jax
import jax.numpy as jnp
from jax.experimental import pallas as pl
from jax.experimental.pallas import tpu as pltpu

# ----- config (small, deterministic, consistent with the module) -----
BATCH = 2
SEQ = 8
HIDDEN = 32
NUM_HEADS = 4
HEAD_DIM = HIDDEN // NUM_HEADS
ROWS = BATCH * SEQ
LN_EPS = 1e-12          # BERT-style default layer_norm_eps


def _qformer_attention_kernel(
    x_ref,       # (ROWS, H)     hidden_states, batch folded into rows (row = b*S + s)
    w_ref,       # (H, 4*H)      packed [Wq | Wk | Wv | Wo], lane-dense 128-wide slab
    vec_ref,     # (2, 4*H)      row0 = [bq | bk | bv | bo], row1 = [gamma | beta | 0...]
    out_ref,     # (ROWS, H)
):
    x = x_ref[...]                                                       # (16, 32)

    # ---- fused, lane-dense QKV projection: one (16,32)x(32,96) MXU pass ----
    qkv = jnp.dot(x, w_ref[:, :3 * HIDDEN],
                  preferred_element_type=jnp.float32) + vec_ref[0:1, :3 * HIDDEN]  # (16, 96)

    # ---- split heads & un-fold batch into one leading (head, batch) axis ----
    # qkv lanes: [q_h0..q_h3 | k_h0..k_h3 | v_h0..v_h3], HEAD_DIM lanes each; rows are b*S+s.
    def split_heads(col_base):
        parts = []
        for h in range(NUM_HEADS):
            lo = col_base + h * HEAD_DIM
            col = qkv[:, lo:lo + HEAD_DIM]                               # (16, 8) lane slice
            for b in range(BATCH):
                parts.append(col[b * SEQ:(b + 1) * SEQ])                 # (8, 8) row block
        return jnp.stack(parts, axis=0)                                  # (NH*B, S, DH)=(8,8,8)

    q = split_heads(0)
    k = split_heads(HIDDEN)
    v = split_heads(2 * HIDDEN)

    # ---- scaled dot-product attention batched over (head, batch); no mask needed ----
    scores = jnp.einsum("nqd,nkd->nqk", q, k,
                        preferred_element_type=jnp.float32) * (1.0 / math.sqrt(HEAD_DIM))
    scores = scores - jnp.max(scores, axis=-1, keepdims=True)            # stable softmax
    e = jnp.exp(scores)
    probs = e * pl.reciprocal(jnp.sum(e, axis=-1, keepdims=True), approx=True)
    # dropout(attention_probs) is identity in eval mode
    ctx = jnp.einsum("nqk,nkd->nqd", probs, v,
                     preferred_element_type=jnp.float32)                 # (NH*B, S, DH)

    # ---- merge heads back into lanes once, then ONE (16,32)x(32,32) output matmul ----
    ctx2 = jnp.concatenate(
        [jnp.concatenate([ctx[h * BATCH + b] for h in range(NUM_HEADS)], axis=1)   # (S, H)
         for b in range(BATCH)],
        axis=0)                                                          # (ROWS, H) = (16, 32)

    proj = jnp.dot(ctx2, w_ref[:, 3 * HIDDEN:],
                   preferred_element_type=jnp.float32) + vec_ref[0:1, 3 * HIDDEN:4 * HIDDEN]

    # ---- Blip2QFormerSelfOutput: residual + LayerNorm (single-pass variance) ----
    h_res = proj + x                                                     # residual with ORIGINAL x
    mean = jnp.mean(h_res, axis=-1, keepdims=True)
    var = jnp.mean(h_res * h_res, axis=-1, keepdims=True) - mean * mean
    normed = (h_res - mean) * jax.lax.rsqrt(var + LN_EPS)
    gamma = vec_ref[1:2, :HIDDEN]
    beta = vec_ref[1:2, HIDDEN:2 * HIDDEN]
    out_ref[...] = normed * gamma + beta


def blip2_qformer_attention(x, params):
    """x: (B, S, H) float32. params: dict of weights (see init_params)."""
    B, S, H = x.shape
    assert (B, S, H) == (BATCH, SEQ, HIDDEN)

    # ---- wrapper-side packing into 3 dense operands (one-time, outside the kernel) ----
    x2 = x.reshape(B * S, H)

    # (H, 4H) = (32, 128) lane-dense weight slab: [Wq | Wk | Wv | Wo]
    w_slab = jnp.concatenate(
        [params["wq"], params["wk"], params["wv"], params["wo"]], axis=1)
    # (2, 128) vector slab: row0 = [bq | bk | bv | bo], row1 = [gamma | beta | zeros]
    vec_slab = jnp.concatenate([
        jnp.concatenate([params["bq"], params["bk"], params["bv"], params["bo"]], axis=1),
        jnp.concatenate([params["ln_gamma"], params["ln_beta"],
                         jnp.zeros((1, 2 * H), jnp.float32)], axis=1),
    ], axis=0)

    # advisory cost hint so XLA can overlap neighbouring HLO with this tiny custom call
    flops = (2 * ROWS * HIDDEN * 3 * HIDDEN                       # QKV projection
             + 2 * (2 * NUM_HEADS * BATCH * SEQ * SEQ * HEAD_DIM)  # scores + context
             + 2 * ROWS * HIDDEN * HIDDEN)                         # output projection
    transcendentals = NUM_HEADS * BATCH * SEQ * SEQ + NUM_HEADS * BATCH * SEQ + ROWS
    bytes_accessed = 4 * (2 * ROWS * HIDDEN + HIDDEN * 4 * HIDDEN + 2 * 4 * HIDDEN)

    vmem = pl.BlockSpec(memory_space=pltpu.MemorySpace.VMEM)
    out2 = pl.pallas_call(
        _qformer_attention_kernel,
        out_shape=jax.ShapeDtypeStruct((B * S, H), jnp.float32),
        in_specs=[vmem, vmem, vmem],
        out_specs=vmem,
        cost_estimate=pl.CostEstimate(
            flops=flops, transcendentals=transcendentals, bytes_accessed=bytes_accessed),
        compiler_params=pltpu.CompilerParams(),
    )(x2, w_slab, vec_slab)
    return out2.reshape(B, S, H)


def reference_attention(x, params):
    """Pure-JAX reference matching the PyTorch module (eval mode, absolute pos-emb)."""
    B, S, H = x.shape
    q = x @ params["wq"] + params["bq"]
    k = x @ params["wk"] + params["bk"]
    v = x @ params["wv"] + params["bv"]

    def split(t):                              # (B,S,H) -> (B,NH,S,DH)
        return t.reshape(B, S, NUM_HEADS, HEAD_DIM).transpose(0, 2, 1, 3)

    qh, kh, vh = split(q), split(k), split(v)
    scores = jnp.einsum("bhqd,bhkd->bhqk", qh, kh) / math.sqrt(HEAD_DIM)
    probs = jax.nn.softmax(scores, axis=-1)
    ctx = jnp.einsum("bhqk,bhkd->bhqd", probs, vh)
    ctx = ctx.transpose(0, 2, 1, 3).reshape(B, S, H)
    proj = ctx @ params["wo"] + params["bo"]
    h_res = proj + x
    mean = jnp.mean(h_res, axis=-1, keepdims=True)
    var = jnp.mean((h_res - mean) ** 2, axis=-1, keepdims=True)
    return (h_res - mean) / jnp.sqrt(var + LN_EPS) * params["ln_gamma"] + params["ln_beta"]


def init_params(key, hidden):
    """Deterministic synthetic parameter init (shapes match the nn.Module)."""
    ks = jax.random.split(key, 8)
    scale = 0.02

    def lin(k):
        # stored as (in_features, out_features) for x @ W + b
        return scale * jax.random.normal(k, (hidden, hidden), jnp.float32)

    return {
        "wq": lin(ks[0]), "bq": scale * jax.random.normal(ks[1], (1, hidden), jnp.float32),
        "wk": lin(ks[2]), "bk": scale * jax.random.normal(ks[3], (1, hidden), jnp.float32),
        "wv": lin(ks[4]), "bv": scale * jax.random.normal(ks[5], (1, hidden), jnp.float32),
        "wo": lin(ks[6]), "bo": scale * jax.random.normal(ks[7], (1, hidden), jnp.float32),
        "ln_gamma": jnp.ones((1, hidden), jnp.float32),
        "ln_beta": jnp.zeros((1, hidden), jnp.float32),
    }


if __name__ == "__main__":
    key = jax.random.PRNGKey(0)
    k_x, k_p = jax.random.split(key)

    x = jax.random.normal(k_x, (BATCH, SEQ, HIDDEN), jnp.float32)
    params = init_params(k_p, HIDDEN)

    # TODO(synk): attention_mask / head_mask / cross-attention / past_key_value /
    # relative position-embedding branches are not exercised (all None / 'absolute').

    out = blip2_qformer_attention(x, params)
    jax.block_until_ready(out)

    ref = reference_attention(x, params)
    assert out.shape == (BATCH, SEQ, HIDDEN)
    assert jnp.all(jnp.isfinite(out))
    err = float(jnp.max(jnp.abs(out - ref)))
    assert jnp.allclose(out, ref, atol=2e-4, rtol=2e-4), err
    print("KERNEL_OK")
</pallas_src>

<mosaic_0001>
module attributes {stable_mosaic.version = 11 : i64} {
  func.func @_qformer_attention_kernel(%arg0: memref<16x32xf32, #tpu.memory_space<vmem>>, %arg1: memref<32x128xf32, #tpu.memory_space<vmem>>, %arg2: memref<2x128xf32, #tpu.memory_space<vmem>>, %arg3: memref<16x32xf32, #tpu.memory_space<vmem>>) attributes {dimension_semantics = [], scalar_prefetch = 0 : i64, scratch_operands = 0 : i64, tpu.core_type = #tpu.core_type<tc>} {
    %c0 = arith.constant 0 : index
    %c0_0 = arith.constant 0 : index
    %0 = vector.load %arg0[%c0, %c0_0] : memref<16x32xf32, #tpu.memory_space<vmem>>, vector<16x32xf32>
    %c0_1 = arith.constant 0 : index
    %c0_2 = arith.constant 0 : index
    %1 = vector.load %arg1[%c0_1, %c0_2] : memref<32x128xf32, #tpu.memory_space<vmem>>, vector<32x96xf32>
    %cst = arith.constant dense<0.000000e+00> : vector<16x96xf32>
    %2 = tpu.matmul %0, %1, %cst {dimension_numbers = #tpu.dot_dimension_numbers<[1], [0], [0], [1], [0, 0, 1, 1], [], []>} : vector<16x32xf32>, vector<32x96xf32>, vector<16x96xf32> -> vector<16x96xf32>
    %c0_3 = arith.constant 0 : index
    %c0_4 = arith.constant 0 : index
    %3 = vector.load %arg2[%c0_3, %c0_4] : memref<2x128xf32, #tpu.memory_space<vmem>>, vector<1x96xf32>
    %4 = vector.broadcast %3 : vector<1x96xf32> to vector<16x96xf32>
    %5 = arith.addf %2, %4 : vector<16x96xf32>
    %6 = vector.extract_strided_slice %5 {offsets = [0, 0], sizes = [16, 8], strides = [1, 1]} : vector<16x96xf32> to vector<16x8xf32>
    %7 = vector.extract_strided_slice %6 {offsets = [0, 0], sizes = [8, 8], strides = [1, 1]} : vector<16x8xf32> to vector<8x8xf32>
    %8 = vector.extract_strided_slice %6 {offsets = [8, 0], sizes = [8, 8], strides = [1, 1]} : vector<16x8xf32> to vector<8x8xf32>
    %9 = vector.extract_strided_slice %5 {offsets = [0, 8], sizes = [16, 8], strides = [1, 1]} : vector<16x96xf32> to vector<16x8xf32>
    %10 = vector.extract_strided_slice %9 {offsets = [0, 0], sizes = [8, 8], strides = [1, 1]} : vector<16x8xf32> to vector<8x8xf32>
    %11 = vector.extract_strided_slice %9 {offsets = [8, 0], sizes = [8, 8], strides = [1, 1]} : vector<16x8xf32> to vector<8x8xf32>
    %12 = vector.extract_strided_slice %5 {offsets = [0, 16], sizes = [16, 8], strides = [1, 1]} : vector<16x96xf32> to vector<16x8xf32>
    %13 = vector.extract_strided_slice %12 {offsets = [0, 0], sizes = [8, 8], strides = [1, 1]} : vector<16x8xf32> to vector<8x8xf32>
    %14 = vector.extract_strided_slice %12 {offsets = [8, 0], sizes = [8, 8], strides = [1, 1]} : vector<16x8xf32> to vector<8x8xf32>
    %15 = vector.extract_strided_slice %5 {offsets = [0, 24], sizes = [16, 8], strides = [1, 1]} : vector<16x96xf32> to vector<16x8xf32>
    %16 = vector.extract_strided_slice %15 {offsets = [0, 0], sizes = [8, 8], strides = [1, 1]} : vector<16x8xf32> to vector<8x8xf32>
    %17 = vector.extract_strided_slice %15 {offsets = [8, 0], sizes = [8, 8], strides = [1, 1]} : vector<16x8xf32> to vector<8x8xf32>
    %18 = vector.shape_cast %7 : vector<8x8xf32> to vector<1x8x8xf32>
    %19 = vector.shape_cast %8 : vector<8x8xf32> to vector<1x8x8xf32>
    %20 = vector.shape_cast %10 : vector<8x8xf32> to vector<1x8x8xf32>
    %21 = vector.shape_cast %11 : vector<8x8xf32> to vector<1x8x8xf32>
    %22 = vector.shape_cast %13 : vector<8x8xf32> to vector<1x8x8xf32>
    %23 = vector.shape_cast %14 : vector<8x8xf32> to vector<1x8x8xf32>
    %24 = vector.shape_cast %16 : vector<8x8xf32> to vector<1x8x8xf32>
    %25 = vector.shape_cast %17 : vector<8x8xf32> to vector<1x8x8xf32>
    %26 = tpu.concatenate %18, %19, %20, %21, %22, %23, %24, %25 in 0 : vector<1x8x8xf32>, vector<1x8x8xf32>, vector<1x8x8xf32>, vector<1x8x8xf32>, vector<1x8x8xf32>, vector<1x8x8xf32>, vector<1x8x8xf32>, vector<1x8x8xf32> -> vector<8x8x8xf32>
    %27 = vector.extract_strided_slice %5 {offsets = [0, 32], sizes = [16, 8], strides = [1, 1]} : vector<16x96xf32> to vector<16x8xf32>
    %28 = vector.extract_strided_slice %27 {offsets = [0, 0], sizes = [8, 8], strides = [1, 1]} : vector<16x8xf32> to vector<8x8xf32>
    %29 = vector.extract_strided_slice %27 {offsets = [8, 0], sizes = [8, 8], strides = [1, 1]} : vector<16x8xf32> to vector<8x8xf32>
    %30 = vector.extract_strided_slice %5 {offsets = [0, 40], sizes = [16, 8], strides = [1, 1]} : vector<16x96xf32> to vector<16x8xf32>
    %31 = vector.extract_strided_slice %30 {offsets = [0, 0], sizes = [8, 8], strides = [1, 1]} : vector<16x8xf32> to vector<8x8xf32>
    %32 = vector.extract_strided_slice %30 {offsets = [8, 0], sizes = [8, 8], strides = [1, 1]} : vector<16x8xf32> to vector<8x8xf32>
    %33 = vector.extract_strided_slice %5 {offsets = [0, 48], sizes = [16, 8], strides = [1, 1]} : vector<16x96xf32> to vector<16x8xf32>
    %34 = vector.extract_strided_slice %33 {offsets = [0, 0], sizes = [8, 8], strides = [1, 1]} : vector<16x8xf32> to vector<8x8xf32>
    %35 = vector.extract_strided_slice %33 {offsets = [8, 0], sizes = [8, 8], strides = [1, 1]} : vector<16x8xf32> to vector<8x8xf32>
    %36 = vector.extract_strided_slice %5 {offsets = [0, 56], sizes = [16, 8], strides = [1, 1]} : vector<16x96xf32> to vector<16x8xf32>
    %37 = vector.extract_strided_slice %36 {offsets = [0, 0], sizes = [8, 8], strides = [1, 1]} : vector<16x8xf32> to vector<8x8xf32>
    %38 = vector.extract_strided_slice %36 {offsets = [8, 0], sizes = [8, 8], strides = [1, 1]} : vector<16x8xf32> to vector<8x8xf32>
    %39 = vector.shape_cast %28 : vector<8x8xf32> to vector<1x8x8xf32>
    %40 = vector.shape_cast %29 : vector<8x8xf32> to vector<1x8x8xf32>
    %41 = vector.shape_cast %31 : vector<8x8xf32> to vector<1x8x8xf32>
    %42 = vector.shape_cast %32 : vector<8x8xf32> to vector<1x8x8xf32>
    %43 = vector.shape_cast %34 : vector<8x8xf32> to vector<1x8x8xf32>
    %44 = vector.shape_cast %35 : vector<8x8xf32> to vector<1x8x8xf32>
    %45 = vector.shape_cast %37 : vector<8x8xf32> to vector<1x8x8xf32>
    %46 = vector.shape_cast %38 : vector<8x8xf32> to vector<1x8x8xf32>
    %47 = tpu.concatenate %39, %40, %41, %42, %43, %44, %45, %46 in 0 : vector<1x8x8xf32>, vector<1x8x8xf32>, vector<1x8x8xf32>, vector<1x8x8xf32>, vector<1x8x8xf32>, vector<1x8x8xf32>, vector<1x8x8xf32>, vector<1x8x8xf32> -> vector<8x8x8xf32>
    %48 = vector.extract_strided_slice %5 {offsets = [0, 64], sizes = [16, 8], strides = [1, 1]} : vector<16x96xf32> to vector<16x8xf32>
    %49 = vector.extract_strided_slice %48 {offsets = [0, 0], sizes = [8, 8], strides = [1, 1]} : vector<16x8xf32> to vector<8x8xf32>
    %50 = vector.extract_strided_slice %48 {offsets = [8, 0], sizes = [8, 8], strides = [1, 1]} : vector<16x8xf32> to vector<8x8xf32>
    %51 = vector.extract_strided_slice %5 {offsets = [0, 72], sizes = [16, 8], strides = [1, 1]} : vector<16x96xf32> to vector<16x8xf32>
    %52 = vector.extract_strided_slice %51 {offsets = [0, 0], sizes = [8, 8], strides = [1, 1]} : vector<16x8xf32> to vector<8x8xf32>
    %53 = vector.extract_strided_slice %51 {offsets = [8, 0], sizes = [8, 8], strides = [1, 1]} : vector<16x8xf32> to vector<8x8xf32>
    %54 = vector.extract_strided_slice %5 {offsets = [0, 80], sizes = [16, 8], strides = [1, 1]} : vector<16x96xf32> to vector<16x8xf32>
    %55 = vector.extract_strided_slice %54 {offsets = [0, 0], sizes = [8, 8], strides = [1, 1]} : vector<16x8xf32> to vector<8x8xf32>
    %56 = vector.extract_strided_slice %54 {offsets = [8, 0], sizes = [8, 8], strides = [1, 1]} : vector<16x8xf32> to vector<8x8xf32>
    %57 = vector.extract_strided_slice %5 {offsets = [0, 88], sizes = [16, 8], strides = [1, 1]} : vector<16x96xf32> to vector<16x8xf32>
    %58 = vector.extract_strided_slice %57 {offsets = [0, 0], sizes = [8, 8], strides = [1, 1]} : vector<16x8xf32> to vector<8x8xf32>
    %59 = vector.extract_strided_slice %57 {offsets = [8, 0], sizes = [8, 8], strides = [1, 1]} : vector<16x8xf32> to vector<8x8xf32>
    %60 = vector.shape_cast %49 : vector<8x8xf32> to vector<1x8x8xf32>
    %61 = vector.shape_cast %50 : vector<8x8xf32> to vector<1x8x8xf32>
    %62 = vector.shape_cast %52 : vector<8x8xf32> to vector<1x8x8xf32>
    %63 = vector.shape_cast %53 : vector<8x8xf32> to vector<1x8x8xf32>
    %64 = vector.shape_cast %55 : vector<8x8xf32> to vector<1x8x8xf32>
    %65 = vector.shape_cast %56 : vector<8x8xf32> to vector<1x8x8xf32>
    %66 = vector.shape_cast %58 : vector<8x8xf32> to vector<1x8x8xf32>
    %67 = vector.shape_cast %59 : vector<8x8xf32> to vector<1x8x8xf32>
    %68 = tpu.concatenate %60, %61, %62, %63, %64, %65, %66, %67 in 0 : vector<1x8x8xf32>, vector<1x8x8xf32>, vector<1x8x8xf32>, vector<1x8x8xf32>, vector<1x8x8xf32>, vector<1x8x8xf32>, vector<1x8x8xf32>, vector<1x8x8xf32> -> vector<8x8x8xf32>
    "tpu.trace_start"() <{level = 10 : i32, message = "nqd,nkd->nqk"}> : () -> ()
    %cst_5 = arith.constant dense<0.000000e+00> : vector<8x8x8xf32>
    %69 = tpu.matmul %26, %47, %cst_5 {dimension_numbers = #tpu.dot_dimension_numbers<[2], [2], [1], [1], [0, 0, 0, 1, 1, 1], [0], [0]>} : vector<8x8x8xf32>, vector<8x8x8xf32>, vector<8x8x8xf32> -> vector<8x8x8xf32>
    "tpu.trace_stop"() : () -> ()
    %cst_6 = arith.constant 0.353553385 : f32
    %70 = vector.broadcast %cst_6 : f32 to vector<8x8x8xf32>
    %71 = arith.mulf %69, %70 : vector<8x8x8xf32>
    %cst_7 = arith.constant dense<0xFF800000> : vector<8x8xf32>
    %72 = vector.multi_reduction <maximumf>, %71, %cst_7 [2] : vector<8x8x8xf32> to vector<8x8xf32>
    %73 = vector.shape_cast %72 : vector<8x8xf32> to vector<8x8x1xf32>
    %74 = vector.broadcast %73 : vector<8x8x1xf32> to vector<8x8x8xf32>
    %75 = arith.subf %71, %74 : vector<8x8x8xf32>
    %76 = math.exp %75 : vector<8x8x8xf32>
    %cst_8 = arith.constant dense<0.000000e+00> : vector<8x8xf32>
    %77 = vector.multi_reduction <add>, %76, %cst_8 [2] : vector<8x8x8xf32> to vector<8x8xf32>
    %78 = vector.shape_cast %77 : vector<8x8xf32> to vector<8x8x1xf32>
    %79 = tpu.reciprocal %78 {approx = true} : vector<8x8x1xf32> -> vector<8x8x1xf32>
    %80 = vector.broadcast %79 : vector<8x8x1xf32> to vector<8x8x8xf32>
    %81 = arith.mulf %76, %80 : vector<8x8x8xf32>
    "tpu.trace_start"() <{level = 10 : i32, message = "nqk,nkd->nqd"}> : () -> ()
    %cst_9 = arith.constant dense<0.000000e+00> : vector<8x8x8xf32>
    %82 = tpu.matmul %81, %68, %cst_9 {dimension_numbers = #tpu.dot_dimension_numbers<[2], [1], [1], [2], [0, 0, 0, 1, 1, 2], [0], [0]>} : vector<8x8x8xf32>, vector<8x8x8xf32>, vector<8x8x8xf32> -> vector<8x8x8xf32>
    "tpu.trace_stop"() : () -> ()
    %83 = vector.extract_strided_slice %82 {offsets = [0, 0, 0], sizes = [1, 8, 8], strides = [1, 1, 1]} : vector<8x8x8xf32> to vector<1x8x8xf32>
    %84 = vector.shape_cast %83 : vector<1x8x8xf32> to vector<8x8xf32>
    %85 = vector.extract_strided_slice %82 {offsets = [2, 0, 0], sizes = [1, 8, 8], strides = [1, 1, 1]} : vector<8x8x8xf32> to vector<1x8x8xf32>
    %86 = vector.shape_cast %85 : vector<1x8x8xf32> to vector<8x8xf32>
    %87 = vector.extract_strided_slice %82 {offsets = [4, 0, 0], sizes = [1, 8, 8], strides = [1, 1, 1]} : vector<8x8x8xf32> to vector<1x8x8xf32>
    %88 = vector.shape_cast %87 : vector<1x8x8xf32> to vector<8x8xf32>
    %89 = vector.extract_strided_slice %82 {offsets = [6, 0, 0], sizes = [1, 8, 8], strides = [1, 1, 1]} : vector<8x8x8xf32> to vector<1x8x8xf32>
    %90 = vector.shape_cast %89 : vector<1x8x8xf32> to vector<8x8xf32>
    %91 = tpu.concatenate %84, %86, %88, %90 in 1 : vector<8x8xf32>, vector<8x8xf32>, vector<8x8xf32>, vector<8x8xf32> -> vector<8x32xf32>
    %92 = vector.extract_strided_slice %82 {offsets = [1, 0, 0], sizes = [1, 8, 8], strides = [1, 1, 1]} : vector<8x8x8xf32> to vector<1x8x8xf32>
    %93 = vector.shape_cast %92 : vector<1x8x8xf32> to vector<8x8xf32>
    %94 = vector.extract_strided_slice %82 {offsets = [3, 0, 0], sizes = [1, 8, 8], strides = [1, 1, 1]} : vector<8x8x8xf32> to vector<1x8x8xf32>
    %95 = vector.shape_cast %94 : vector<1x8x8xf32> to vector<8x8xf32>
    %96 = vector.extract_strided_slice %82 {offsets = [5, 0, 0], sizes = [1, 8, 8], strides = [1, 1, 1]} : vector<8x8x8xf32> to vector<1x8x8xf32>
    %97 = vector.shape_cast %96 : vector<1x8x8xf32> to vector<8x8xf32>
    %98 = vector.extract_strided_slice %82 {offsets = [7, 0, 0], sizes = [1, 8, 8], strides = [1, 1, 1]} : vector<8x8x8xf32> to vector<1x8x8xf32>
    %99 = vector.shape_cast %98 : vector<1x8x8xf32> to vector<8x8xf32>
    %100 = tpu.concatenate %93, %95, %97, %99 in 1 : vector<8x8xf32>, vector<8x8xf32>, vector<8x8xf32>, vector<8x8xf32> -> vector<8x32xf32>
    %101 = tpu.concatenate %91, %100 in 0 : vector<8x32xf32>, vector<8x32xf32> -> vector<16x32xf32>
    %c0_10 = arith.constant 0 : index
    %c96 = arith.constant 96 : index
    %102 = vector.load %arg1[%c0_10, %c96] : memref<32x128xf32, #tpu.memory_space<vmem>>, vector<32x32xf32>
    %cst_11 = arith.constant dense<0.000000e+00> : vector<16x32xf32>
    %103 = tpu.matmul %101, %102, %cst_11 {dimension_numbers = #tpu.dot_dimension_numbers<[1], [0], [0], [1], [0, 0, 1, 1], [], []>} : vector<16x32xf32>, vector<32x32xf32>, vector<16x32xf32> -> vector<16x32xf32>
    %c0_12 = arith.constant 0 : index
    %c96_13 = arith.constant 96 : index
    %104 = vector.load %arg2[%c0_12, %c96_13] : memref<2x128xf32, #tpu.memory_space<vmem>>, vector<1x32xf32>
    %105 = vector.broadcast %104 : vector<1x32xf32> to vector<16x32xf32>
    %106 = arith.addf %103, %105 : vector<16x32xf32>
    %107 = arith.addf %106, %0 : vector<16x32xf32>
    %cst_14 = arith.constant dense<0.000000e+00> : vector<16xf32>
    %108 = vector.multi_reduction <add>, %107, %cst_14 [1] : vector<16x32xf32> to vector<16xf32>
    %109 = vector.shape_cast %108 : vector<16xf32> to vector<16x1xf32>
    %cst_15 = arith.constant 3.200000e+01 : f32
    %110 = vector.broadcast %cst_15 : f32 to vector<16x1xf32>
    %111 = arith.divf %109, %110 : vector<16x1xf32>
    %112 = arith.mulf %107, %107 : vector<16x32xf32>
    %cst_16 = arith.constant dense<0.000000e+00> : vector<16xf32>
    %113 = vector.multi_reduction <add>, %112, %cst_16 [1] : vector<16x32xf32> to vector<16xf32>
    %114 = vector.shape_cast %113 : vector<16xf32> to vector<16x1xf32>
    %cst_17 = arith.constant 3.200000e+01 : f32
    %115 = vector.broadcast %cst_17 : f32 to vector<16x1xf32>
    %116 = arith.divf %114, %115 : vector<16x1xf32>
    %117 = arith.mulf %111, %111 : vector<16x1xf32>
    %118 = arith.subf %116, %117 : vector<16x1xf32>
    %119 = vector.broadcast %111 : vector<16x1xf32> to vector<16x32xf32>
    %120 = arith.subf %107, %119 : vector<16x32xf32>
    %cst_18 = arith.constant 9.99999996E-13 : f32
    %121 = vector.broadcast %cst_18 : f32 to vector<16x1xf32>
    %122 = arith.addf %118, %121 : vector<16x1xf32>
    %123 = math.rsqrt %122 : vector<16x1xf32>
    %124 = vector.broadcast %123 : vector<16x1xf32> to vector<16x32xf32>
    %125 = arith.mulf %120, %124 : vector<16x32xf32>
    %c1 = arith.constant 1 : index
    %c0_19 = arith.constant 0 : index
    %126 = vector.load %arg2[%c1, %c0_19] : memref<2x128xf32, #tpu.memory_space<vmem>>, vector<1x32xf32>
    %c1_20 = arith.constant 1 : index
    %c32 = arith.constant 32 : index
    %127 = vector.load %arg2[%c1_20, %c32] : memref<2x128xf32, #tpu.memory_space<vmem>>, vector<1x32xf32>
    %128 = vector.broadcast %126 : vector<1x32xf32> to vector<16x32xf32>
    %129 = arith.mulf %125, %128 : vector<16x32xf32>
    %130 = vector.broadcast %127 : vector<1x32xf32> to vector<16x32xf32>
    %131 = arith.addf %129, %130 : vector<16x32xf32>
    %c0_21 = arith.constant 0 : index
    %c0_22 = arith.constant 0 : index
    %132 = vector.load %arg3[%c0_21, %c0_22] : memref<16x32xf32, #tpu.memory_space<vmem>>, vector<16x32xf32>
    tpu.vector_store %arg3[%c0_21, %c0_22], %131 {strides = array<i32>} : memref<16x32xf32, #tpu.memory_space<vmem>>, vector<16x32xf32>,
    return
  }
}

</mosaic_0001>

<llo_original>
// kernel: tpu_custom_call.1
$region0: #{tpu_custom_call.1}
  #allocation0 [shape = 'u32[]', space=smem, size = 0x4, offset = 0x4, fixed_abs, tag = 'smem constant byte address 0x4 - core index']
  #allocation1 [shape = 'u32[144,128]{1,0:T(1,128)}', space=vmem, size = 0x12000, scoped, tag = 'internal scratch']
  %s0 = inlined_call_operand.hbm [shape: f32[16,32], index: 0, kind: input, shape index: {}]
  %s1 = inlined_call_operand.hbm [shape: f32[32,128], index: 1, kind: input, shape index: {}]
  %s2 = inlined_call_operand.vmem [shape: f32[2,128], index: 2, kind: input, shape index: {}]
  %s3 = inlined_call_operand.hbm [shape: f32[16,32], index: 3, kind: output, shape index: {}]
  %s4 = sld [smem:[#allocation0]]
  $region30: #{tpu_custom_call.1} parent=0
    _
  %s6 = ssub.s32 1, %s4
  %s7 = scalar_select 0, %s6, %s4
  $region1: #{tpu_custom_call.1} parent=0
    #allocation2 [shape = 'u8[8192]{0}', space=vmem, size = 0x2000, scoped, tag = 'input window, operand 0, single buffered']
    #allocation3 [shape = 's32[1]{0}', space=sflag, size = 0x4, scoped, tag = 'scoped memory for tpu_custom_call.1']
    #allocation4 [shape = 's32[1]{0}', space=sflag, size = 0x4, scoped, tag = 'scoped memory for tpu_custom_call.1']
    #allocation5 [shape = 'u8[16384]{0}', space=vmem, size = 0x4000, scoped, tag = 'input window, operand 1, single buffered']
    #allocation6 [shape = 's32[1]{0}', space=sflag, size = 0x4, scoped, tag = 'scoped memory for tpu_custom_call.1']
    #allocation7 [shape = 'u8[8192]{0}', space=vmem, size = 0x2000, scoped, tag = 'output window, operand 0, single buffered']
    %8 = vsyncpa [#allocation3], 0
    %9 = vsyncpa [#allocation6], 0
    %10 = vsyncpa [#allocation4], 0
    // Predicated region
    $region2: #{tpu_custom_call.1} parent=1 // pred_check
      _
    $region3: #{tpu_custom_call.1} parent=1 // pred_check_branch
      %12 = sbr.rel (0) target = $region5
    $region4: #{tpu_custom_call.1} parent=1 // pred_region
      %s14 = ssub.s32 256, 256
      %15 = vsyncadd [#allocation3], %s14
      %s16 = sshll.u32 [#allocation2], 4
      %s17 = int_to_ptr.vmem [resolvable:$true] %s16
      %22 = dma.hbm_to_vmem [thread:$0]  %s0, 256, %s17, [#allocation3], 128, 128, 8
    $region5: #{tpu_custom_call.1} parent=1 // pred_fallthru
      _
    // Predicated region
    $region6: #{tpu_custom_call.1} parent=1 // pred_check
      _
    $region7: #{tpu_custom_call.1} parent=1 // pred_check_branch
      %24 = sbr.rel (0) target = $region9
    $region8: #{tpu_custom_call.1} parent=1 // pred_region
      %s26 = ssub.s32 512, 512
      %27 = vsyncadd [#allocation6], %s26
      %s28 = sshll.u32 [#allocation5], 4
      %s29 = int_to_ptr.vmem [resolvable:$true] %s28
      %34 = dma.hbm_to_vmem [thread:$0]  %s1, 512, %s29, [#allocation6], 128, 128, 8
    $region9: #{tpu_custom_call.1} parent=1 // pred_fallthru
      _
    // Predicated region
    $region10: #{tpu_custom_call.1} parent=1 // pred_check
      _
    $region11: #{tpu_custom_call.1} parent=1 // pred_check_branch
      %36 = sbr.rel (0) target = $region13
    $region12: #{tpu_custom_call.1} parent=1 // pred_region
      _
    $region13: #{tpu_custom_call.1} parent=1 // pred_fallthru
      _
    // Predicated region
    $region14: #{tpu_custom_call.1} parent=1 // pred_check
      _
    $region15: #{tpu_custom_call.1} parent=1 // pred_check_branch
      %38 = sbr.rel (0) target = $region17
    $region16: #{tpu_custom_call.1} parent=1 // pred_region
      %39 = dma.done [#allocation3], 256
    $region17: #{tpu_custom_call.1} parent=1 // pred_fallthru
      _
    // Predicated region
    $region18: #{tpu_custom_call.1} parent=1 // pred_check
      _
    $region19: #{tpu_custom_call.1} parent=1 // pred_check_branch
      %41 = sbr.rel (0) target = $region21
    $region20: #{tpu_custom_call.1} parent=1 // pred_region
      %42 = dma.done [#allocation6], 512
    $region21: #{tpu_custom_call.1} parent=1 // pred_fallthru
      _
    %v43 = vld [vmem:[#allocation2] sm:$0xff]
    %v44 = vld [vmem:[#allocation2 + $0x8] sm:$0xff]
    %v45 = vld [vmem:[#allocation5] sm:$0xff]
    %v46 = vld [vmem:[#allocation5 + $0x8] sm:$0xff]
    %v47 = vld [vmem:[#allocation5 + $0x10] sm:$0xff]
    %v48 = vld [vmem:[#allocation5 + $0x18] sm:$0xff]
    %v49 = vld [vmem:[%s2] sm:$0x1]
    %v50 = vlaneseq
    %v51 = vshrl.u32 %v50, 7
    %v52 = vsub.s32 0, %v51
    %v53 = vrot.slane %v49, %v52
    %vm54 = vcmask 261120
    %v56 = vsel %vm54, %v43, 0
    %v59 = vsel %vm54, %v44, 0
    %61 = vmatprep.subr.mxu0 0.0
    %62 = vmatpush1.msra.mxu0 0.0
    %63 = vmatprep.subr.mxu0 0.0
    %64 = vmatpush1.msra.mxu0 0.0
    %65 = vmatprep.subr.mxu0 0.0
    %66 = vmatpush1.msra.mxu0 0.0
    %67 = vmatprep.subr.mxu0 0.0
    %68 = vmatpush1.msra.mxu0 0.0
    %69 = vmatprep.subr.mxu0 0.0
    %70 = vmatpush1.msra.mxu0 0.0
    %71 = vmatprep.subr.mxu0 0.0
    %72 = vmatpush1.msra.mxu0 0.0
    %73 = vmatprep.subr.mxu0 0.0
    %74 = vmatpush1.msra.mxu0 0.0
    %75 = vmatprep.subr.mxu0 0.0
    %76 = vmatpush1.msra.mxu0 0.0
    %77 = vmatprep.subr.mxu0 0.0
    %78 = vmatpush1.msra.mxu0 0.0
    %79 = vmatprep.subr.mxu0 0.0
    %80 = vmatpush1.msra.mxu0 0.0
    %81 = vmatprep.subr.mxu0 0.0
    %82 = vmatpush1.msra.mxu0 0.0
    %83 = vmatprep.subr.mxu0 0.0
    %84 = vmatpush1.msra.mxu0 0.0
    %85 = vmatprep.subr.mxu0 0.0
    %86 = vmatpush1.msra.mxu0 %v48
    %87 = vmatprep.subr.mxu0 0.0
    %88 = vmatpush1.msra.mxu0 %v47
    %89 = vmatprep.subr.mxu0 0.0
    %90 = vmatpush1.msra.mxu0 %v46
    %91 = vmatprep.subr.mxu0 0.0
    %92 = vmatpush1.msra.mxu0 %v45
    %93 = vmatprep.subr.mxu0 0.0
    %94 = vmatpush2.msra.mxu0 0.0
    %95 = vmatprep.subr.mxu0 0.0
    %96 = vmatpush2.msra.mxu0 0.0
    %97 = vmatprep.subr.mxu0 0.0
    %98 = vmatpush2.msra.mxu0 0.0
    %99 = vmatprep.subr.mxu0 0.0
    %100 = vmatpush2.msra.mxu0 0.0
    %101 = vmatprep.subr.mxu0 0.0
    %102 = vmatpush2.msra.mxu0 0.0
    %103 = vmatprep.subr.mxu0 0.0
    %104 = vmatpush2.msra.mxu0 0.0
    %105 = vmatprep.subr.mxu0 0.0
    %106 = vmatpush2.msra.mxu0 0.0
    %107 = vmatprep.subr.mxu0 0.0
    %108 = vmatpush2.msra.mxu0 0.0
    %109 = vmatprep.subr.mxu0 0.0
    %110 = vmatpush2.msra.mxu0 0.0
    %111 = vmatprep.subr.mxu0 0.0
    %112 = vmatpush2.msra.mxu0 0.0
    %113 = vmatprep.subr.mxu0 0.0
    %114 = vmatpush2.msra.mxu0 0.0
    %115 = vmatprep.subr.mxu0 0.0
    %116 = vmatpush2.msra.mxu0 0.0
    %117 = vmatprep.subr.mxu0 0.0
    %118 = vmatpush2.msra.mxu0 0.0
    %119 = vmatprep.subr.mxu0 0.0
    %120 = vmatpush2.msra.mxu0 0.0
    %121 = vmatprep.subr.mxu0 0.0
    %122 = vmatpush2.msra.mxu0 0.0
    %123 = vmatprep.subr.mxu0 0.0
    %124 = vmatpush2.msra.mxu0 0.0
    %125 = vmatprep.mubr.f32.mxu0 0.0
    %126 = vmatmul.mubr.f32.gmra.mxu0 %v56
    %v127 = vpop.f32.mrf.mxu0
    %v128 = vadd.f32 %v53, %v127
    %v129 = vpop.f32.mrf.mxu0
    %130 = vmatprep.mubr.f32.mxu0 0.0
    %131 = vmatmul.mubr.f32.gmra.mxu0 %v59
    %v132 = vpop.f32.mrf.mxu0
    %v133 = vadd.f32 %v53, %v132
    %v134 = vpop.f32.mrf.mxu0
    %135 = vdwg.mxu0
    %137 = vrot.lane.b32.xlu0 %v128, 120
    %v138 = vpop.permute.xlu0 %137
    %140 = vrot.lane.b32.xlu0 %v133, 120
    %v141 = vpop.permute.xlu0 %140
    %142 = vrot.lane.b32.xlu0 %v128, 112
    %v143 = vpop.permute.xlu0 %142
    %144 = vrot.lane.b32.xlu0 %v133, 112
    %v145 = vpop.permute.xlu0 %144
    %146 = vrot.lane.b32.xlu0 %v128, 104
    %v147 = vpop.permute.xlu0 %146
    %148 = vrot.lane.b32.xlu0 %v133, 104
    %v149 = vpop.permute.xlu0 %148
    %150 = vrot.lane.b32.xlu0 %v128, 96
    %v151 = vpop.permute.xlu0 %150
    %vm152 = vcmask 64512
    %v153 = vsel %vm152, %v128, 0
    %v155 = vsel %vm152, %v151, 0
    %157 = vmatprep.subr.mxu0 0.0
    %158 = vmatpush1.xpose.msra.mxu0 0.0
    %159 = vmatprep.subr.mxu0 0.0
    %160 = vmatpush1.xpose.msra.mxu0 0.0
    %161 = vmatprep.subr.mxu0 0.0
    %162 = vmatpush1.xpose.msra.mxu0 0.0
    %163 = vmatprep.subr.mxu0 0.0
    %164 = vmatpush1.xpose.msra.mxu0 0.0
    %165 = vmatprep.subr.mxu0 0.0
    %166 = vmatpush1.xpose.msra.mxu0 0.0
    %167 = vmatprep.subr.mxu0 0.0
    %168 = vmatpush1.xpose.msra.mxu0 0.0
    %169 = vmatprep.subr.mxu0 0.0
    %170 = vmatpush1.xpose.msra.mxu0 0.0
    %171 = vmatprep.subr.mxu0 0.0
    %172 = vmatpush1.xpose.msra.mxu0 0.0
    %173 = vmatprep.subr.mxu0 0.0
    %174 = vmatpush1.xpose.msra.mxu0 0.0
    %175 = vmatprep.subr.mxu0 0.0
    %176 = vmatpush1.xpose.msra.mxu0 0.0
    %177 = vmatprep.subr.mxu0 0.0
    %178 = vmatpush1.xpose.msra.mxu0 0.0
    %179 = vmatprep.subr.mxu0 0.0
    %180 = vmatpush1.xpose.msra.mxu0 0.0
    %181 = vmatprep.subr.mxu0 0.0
    %182 = vmatpush1.xpose.msra.mxu0 0.0
    %183 = vmatprep.subr.mxu0 0.0
    %184 = vmatpush1.xpose.msra.mxu0 0.0
    %185 = vmatprep.subr.mxu0 0.0
    %186 = vmatpush1.xpose.msra.mxu0 0.0
    %187 = vmatprep.subr.mxu0 0.0
    %188 = vmatpush1.xpose.msra.mxu0 %v155
    %189 = vmatprep.subr.mxu0 0.0
    %190 = vmatpush2.xpose.msra.mxu0 0.0
    %191 = vmatprep.subr.mxu0 0.0
    %192 = vmatpush2.xpose.msra.mxu0 0.0
    %193 = vmatprep.subr.mxu0 0.0
    %194 = vmatpush2.xpose.msra.mxu0 0.0
    %195 = vmatprep.subr.mxu0 0.0
    %196 = vmatpush2.xpose.msra.mxu0 0.0
    %197 = vmatprep.subr.mxu0 0.0
    %198 = vmatpush2.xpose.msra.mxu0 0.0
    %199 = vmatprep.subr.mxu0 0.0
    %200 = vmatpush2.xpose.msra.mxu0 0.0
    %201 = vmatprep.subr.mxu0 0.0
    %202 = vmatpush2.xpose.msra.mxu0 0.0
    %203 = vmatprep.subr.mxu0 0.0
    %204 = vmatpush2.xpose.msra.mxu0 0.0
    %205 = vmatprep.subr.mxu0 0.0
    %206 = vmatpush2.xpose.msra.mxu0 0.0
    %207 = vmatprep.subr.mxu0 0.0
    %208 = vmatpush2.xpose.msra.mxu0 0.0
    %209 = vmatprep.subr.mxu0 0.0
    %210 = vmatpush2.xpose.msra.mxu0 0.0
    %211 = vmatprep.subr.mxu0 0.0
    %212 = vmatpush2.xpose.msra.mxu0 0.0
    %213 = vmatprep.subr.mxu0 0.0
    %214 = vmatpush2.xpose.msra.mxu0 0.0
    %215 = vmatprep.subr.mxu0 0.0
    %216 = vmatpush2.xpose.msra.mxu0 0.0
    %217 = vmatprep.subr.mxu0 0.0
    %218 = vmatpush2.xpose.msra.mxu0 0.0
    %219 = vmatprep.subr.mxu0 0.0
    %220 = vmatpush2.xpose.msra.mxu0 0.0
    %221 = vmatprep.mubr.f32.mxu0 0.0
    %222 = vmatmul.mubr.f32.gmra.mxu0 %v153
    %v223 = vpop.f32.mrf.mxu0
    %v224 = vadd.f32 0.0, %v223
    %v225 = vpop.f32.mrf.mxu0
    %226 = vdwg.mxu0
    %227 = vrot.lane.b32.xlu0 %v133, 96
    %v228 = vpop.permute.xlu0 %227
    %v229 = vsel %vm152, %v133, 0
    %v231 = vsel %vm152, %v228, 0
    %233 = vmatprep.subr.mxu0 0.0
    %234 = vmatpush1.xpose.msra.mxu0 0.0
    %235 = vmatprep.subr.mxu0 0.0
    %236 = vmatpush1.xpose.msra.mxu0 0.0
    %237 = vmatprep.subr.mxu0 0.0
    %238 = vmatpush1.xpose.msra.mxu0 0.0
    %239 = vmatprep.subr.mxu0 0.0
    %240 = vmatpush1.xpose.msra.mxu0 0.0
    %241 = vmatprep.subr.mxu0 0.0
    %242 = vmatpush1.xpose.msra.mxu0 0.0
    %243 = vmatprep.subr.mxu0 0.0
    %244 = vmatpush1.xpose.msra.mxu0 0.0
    %245 = vmatprep.subr.mxu0 0.0
    %246 = vmatpush1.xpose.msra.mxu0 0.0
    %247 = vmatprep.subr.mxu0 0.0
    %248 = vmatpush1.xpose.msra.mxu0 0.0
    %249 = vmatprep.subr.mxu0 0.0
    %250 = vmatpush1.xpose.msra.mxu0 0.0
    %251 = vmatprep.subr.mxu0 0.0
    %252 = vmatpush1.xpose.msra.mxu0 0.0
    %253 = vmatprep.subr.mxu0 0.0
    %254 = vmatpush1.xpose.msra.mxu0 0.0
    %255 = vmatprep.subr.mxu0 0.0
    %256 = vmatpush1.xpose.msra.mxu0 0.0
    %257 = vmatprep.subr.mxu0 0.0
    %258 = vmatpush1.xpose.msra.mxu0 0.0
    %259 = vmatprep.subr.mxu0 0.0
    %260 = vmatpush1.xpose.msra.mxu0 0.0
    %261 = vmatprep.subr.mxu0 0.0
    %262 = vmatpush1.xpose.msra.mxu0 0.0
    %263 = vmatprep.subr.mxu0 0.0
    %264 = vmatpush1.xpose.msra.mxu0 %v231
    %265 = vmatprep.subr.mxu0 0.0
    %266 = vmatpush2.xpose.msra.mxu0 0.0
    %267 = vmatprep.subr.mxu0 0.0
    %268 = vmatpush2.xpose.msra.mxu0 0.0
    %269 = vmatprep.subr.mxu0 0.0
    %270 = vmatpush2.xpose.msra.mxu0 0.0
    %271 = vmatprep.subr.mxu0 0.0
    %272 = vmatpush2.xpose.msra.mxu0 0.0
    %273 = vmatprep.subr.mxu0 0.0
    %274 = vmatpush2.xpose.msra.mxu0 0.0
    %275 = vmatprep.subr.mxu0 0.0
    %276 = vmatpush2.xpose.msra.mxu0 0.0
    %277 = vmatprep.subr.mxu0 0.0
    %278 = vmatpush2.xpose.msra.mxu0 0.0
    %279 = vmatprep.subr.mxu0 0.0
    %280 = vmatpush2.xpose.msra.mxu0 0.0
    %281 = vmatprep.subr.mxu0 0.0
    %282 = vmatpush2.xpose.msra.mxu0 0.0
    %283 = vmatprep.subr.mxu0 0.0
    %284 = vmatpush2.xpose.msra.mxu0 0.0
    %285 = vmatprep.subr.mxu0 0.0
    %286 = vmatpush2.xpose.msra.mxu0 0.0
    %287 = vmatprep.subr.mxu0 0.0
    %288 = vmatpush2.xpose.msra.mxu0 0.0
    %289 = vmatprep.subr.mxu0 0.0
    %290 = vmatpush2.xpose.msra.mxu0 0.0
    %291 = vmatprep.subr.mxu0 0.0
    %292 = vmatpush2.xpose.msra.mxu0 0.0
    %293 = vmatprep.subr.mxu0 0.0
    %294 = vmatpush2.xpose.msra.mxu0 0.0
    %295 = vmatprep.subr.mxu0 0.0
    %296 = vmatpush2.xpose.msra.mxu0 0.0
    %297 = vmatprep.mubr.f32.mxu0 0.0
    %298 = vmatmul.mubr.f32.gmra.mxu0 %v229
    %v299 = vpop.f32.mrf.mxu0
    %v300 = vadd.f32 0.0, %v299
    %v301 = vpop.f32.mrf.mxu0
    %302 = vdwg.mxu0
    %303 = vrot.lane.b32.xlu0 %v138, 96
    %v304 = vpop.permute.xlu0 %303
    %v305 = vsel %vm152, %v138, 0
    %v307 = vsel %vm152, %v304, 0
    %309 = vmatprep.subr.mxu0 0.0
    %310 = vmatpush1.xpose.msra.mxu0 0.0
    %311 = vmatprep.subr.mxu0 0.0
    %312 = vmatpush1.xpose.msra.mxu0 0.0
    %313 = vmatprep.subr.mxu0 0.0
    %314 = vmatpush1.xpose.msra.mxu0 0.0
    %315 = vmatprep.subr.mxu0 0.0
    %316 = vmatpush1.xpose.msra.mxu0 0.0
    %317 = vmatprep.subr.mxu0 0.0
    %318 = vmatpush1.xpose.msra.mxu0 0.0
    %319 = vmatprep.subr.mxu0 0.0
    %320 = vmatpush1.xpose.msra.mxu0 0.0
    %321 = vmatprep.subr.mxu0 0.0
    %322 = vmatpush1.xpose.msra.mxu0 0.0
    %323 = vmatprep.subr.mxu0 0.0
    %324 = vmatpush1.xpose.msra.mxu0 0.0
    %325 = vmatprep.subr.mxu0 0.0
    %326 = vmatpush1.xpose.msra.mxu0 0.0
    %327 = vmatprep.subr.mxu0 0.0
    %328 = vmatpush1.xpose.msra.mxu0 0.0
    %329 = vmatprep.subr.mxu0 0.0
    %330 = vmatpush1.xpose.msra.mxu0 0.0
    %331 = vmatprep.subr.mxu0 0.0
    %332 = vmatpush1.xpose.msra.mxu0 0.0
    %333 = vmatprep.subr.mxu0 0.0
    %334 = vmatpush1.xpose.msra.mxu0 0.0
    %335 = vmatprep.subr.mxu0 0.0
    %336 = vmatpush1.xpose.msra.mxu0 0.0
    %337 = vmatprep.subr.mxu0 0.0
    %338 = vmatpush1.xpose.msra.mxu0 0.0
    %339 = vmatprep.subr.mxu0 0.0
    %340 = vmatpush1.xpose.msra.mxu0 %v307
    %341 = vmatprep.subr.mxu0 0.0
    %342 = vmatpush2.xpose.msra.mxu0 0.0
    %343 = vmatprep.subr.mxu0 0.0
    %344 = vmatpush2.xpose.msra.mxu0 0.0
    %345 = vmatprep.subr.mxu0 0.0
    %346 = vmatpush2.xpose.msra.mxu0 0.0
    %347 = vmatprep.subr.mxu0 0.0
    %348 = vmatpush2.xpose.msra.mxu0 0.0
    %349 = vmatprep.subr.mxu0 0.0
    %350 = vmatpush2.xpose.msra.mxu0 0.0
    %351 = vmatprep.subr.mxu0 0.0
    %352 = vmatpush2.xpose.msra.mxu0 0.0
    %353 = vmatprep.subr.mxu0 0.0
    %354 = vmatpush2.xpose.msra.mxu0 0.0
    %355 = vmatprep.subr.mxu0 0.0
    %356 = vmatpush2.xpose.msra.mxu0 0.0
    %357 = vmatprep.subr.mxu0 0.0
    %358 = vmatpush2.xpose.msra.mxu0 0.0
    %359 = vmatprep.subr.mxu0 0.0
    %360 = vmatpush2.xpose.msra.mxu0 0.0
    %361 = vmatprep.subr.mxu0 0.0
    %362 = vmatpush2.xpose.msra.mxu0 0.0
    %363 = vmatprep.subr.mxu0 0.0
    %364 = vmatpush2.xpose.msra.mxu0 0.0
    %365 = vmatprep.subr.mxu0 0.0
    %366 = vmatpush2.xpose.msra.mxu0 0.0
    %367 = vmatprep.subr.mxu0 0.0
    %368 = vmatpush2.xpose.msra.mxu0 0.0
    %369 = vmatprep.subr.mxu0 0.0
    %370 = vmatpush2.xpose.msra.mxu0 0.0
    %371 = vmatprep.subr.mxu0 0.0
    %372 = vmatpush2.xpose.msra.mxu0 0.0
    %373 = vmatprep.mubr.f32.mxu0 0.0
    %374 = vmatmul.mubr.f32.gmra.mxu0 %v305
    %v375 = vpop.f32.mrf.mxu0
    %v376 = vadd.f32 0.0, %v375
    %v377 = vpop.f32.mrf.mxu0
    %378 = vdwg.mxu0
    %379 = vrot.lane.b32.xlu0 %v141, 96
    %v380 = vpop.permute.xlu0 %379
    %v381 = vsel %vm152, %v141, 0
    %v383 = vsel %vm152, %v380, 0
    %385 = vmatprep.subr.mxu0 0.0
    %386 = vmatpush1.xpose.msra.mxu0 0.0
    %387 = vmatprep.subr.mxu0 0.0
    %388 = vmatpush1.xpose.msra.mxu0 0.0
    %389 = vmatprep.subr.mxu0 0.0
    %390 = vmatpush1.xpose.msra.mxu0 0.0
    %391 = vmatprep.subr.mxu0 0.0
    %392 = vmatpush1.xpose.msra.mxu0 0.0
    %393 = vmatprep.subr.mxu0 0.0
    %394 = vmatpush1.xpose.msra.mxu0 0.0
    %395 = vmatprep.subr.mxu0 0.0
    %396 = vmatpush1.xpose.msra.mxu0 0.0
    %397 = vmatprep.subr.mxu0 0.0
    %398 = vmatpush1.xpose.msra.mxu0 0.0
    %399 = vmatprep.subr.mxu0 0.0
    %400 = vmatpush1.xpose.msra.mxu0 0.0
    %401 = vmatprep.subr.mxu0 0.0
    %402 = vmatpush1.xpose.msra.mxu0 0.0
    %403 = vmatprep.subr.mxu0 0.0
    %404 = vmatpush1.xpose.msra.mxu0 0.0
    %405 = vmatprep.subr.mxu0 0.0
    %406 = vmatpush1.xpose.msra.mxu0 0.0
    %407 = vmatprep.subr.mxu0 0.0
    %408 = vmatpush1.xpose.msra.mxu0 0.0
    %409 = vmatprep.subr.mxu0 0.0
    %410 = vmatpush1.xpose.msra.mxu0 0.0
    %411 = vmatprep.subr.mxu0 0.0
    %412 = vmatpush1.xpose.msra.mxu0 0.0
    %413 = vmatprep.subr.mxu0 0.0
    %414 = vmatpush1.xpose.msra.mxu0 0.0
    %415 = vmatprep.subr.mxu0 0.0
    %416 = vmatpush1.xpose.msra.mxu0 %v383
    %417 = vmatprep.subr.mxu0 0.0
    %418 = vmatpush2.xpose.msra.mxu0 0.0
    %419 = vmatprep.subr.mxu0 0.0
    %420 = vmatpush2.xpose.msra.mxu0 0.0
    %421 = vmatprep.subr.mxu0 0.0
    %422 = vmatpush2.xpose.msra.mxu0 0.0
    %423 = vmatprep.subr.mxu0 0.0
    %424 = vmatpush2.xpose.msra.mxu0 0.0
    %425 = vmatprep.subr.mxu0 0.0
    %426 = vmatpush2.xpose.msra.mxu0 0.0
    %427 = vmatprep.subr.mxu0 0.0
    %428 = vmatpush2.xpose.msra.mxu0 0.0
    %429 = vmatprep.subr.mxu0 0.0
    %430 = vmatpush2.xpose.msra.mxu0 0.0
    %431 = vmatprep.subr.mxu0 0.0
    %432 = vmatpush2.xpose.msra.mxu0 0.0
    %433 = vmatprep.subr.mxu0 0.0
    %434 = vmatpush2.xpose.msra.mxu0 0.0
    %435 = vmatprep.subr.mxu0 0.0
    %436 = vmatpush2.xpose.msra.mxu0 0.0
    %437 = vmatprep.subr.mxu0 0.0
    %438 = vmatpush2.xpose.msra.mxu0 0.0
    %439 = vmatprep.subr.mxu0 0.0
    %440 = vmatpush2.xpose.msra.mxu0 0.0
    %441 = vmatprep.subr.mxu0 0.0
    %442 = vmatpush2.xpose.msra.mxu0 0.0
    %443 = vmatprep.subr.mxu0 0.0
    %444 = vmatpush2.xpose.msra.mxu0 0.0
    %445 = vmatprep.subr.mxu0 0.0
    %446 = vmatpush2.xpose.msra.mxu0 0.0
    %447 = vmatprep.subr.mxu0 0.0
    %448 = vmatpush2.xpose.msra.mxu0 0.0
    %449 = vmatprep.mubr.f32.mxu0 0.0
    %450 = vmatmul.mubr.f32.gmra.mxu0 %v381
    %v451 = vpop.f32.mrf.mxu0
    %v452 = vadd.f32 0.0, %v451
    %v453 = vpop.f32.mrf.mxu0
    %454 = vdwg.mxu0
    %455 = vrot.lane.b32.xlu0 %v143, 96
    %v456 = vpop.permute.xlu0 %455
    %v457 = vsel %vm152, %v143, 0
    %v459 = vsel %vm152, %v456, 0
    %461 = vmatprep.subr.mxu0 0.0
    %462 = vmatpush1.xpose.msra.mxu0 0.0
    %463 = vmatprep.subr.mxu0 0.0
    %464 = vmatpush1.xpose.msra.mxu0 0.0
    %465 = vmatprep.subr.mxu0 0.0
    %466 = vmatpush1.xpose.msra.mxu0 0.0
    %467 = vmatprep.subr.mxu0 0.0
    %468 = vmatpush1.xpose.msra.mxu0 0.0
    %469 = vmatprep.subr.mxu0 0.0
    %470 = vmatpush1.xpose.msra.mxu0 0.0
    %471 = vmatprep.subr.mxu0 0.0
    %472 = vmatpush1.xpose.msra.mxu0 0.0
    %473 = vmatprep.subr.mxu0 0.0
    %474 = vmatpush1.xpose.msra.mxu0 0.0
    %475 = vmatprep.subr.mxu0 0.0
    %476 = vmatpush1.xpose.msra.mxu0 0.0
    %477 = vmatprep.subr.mxu0 0.0
    %478 = vmatpush1.xpose.msra.mxu0 0.0
    %479 = vmatprep.subr.mxu0 0.0
    %480 = vmatpush1.xpose.msra.mxu0 0.0
    %481 = vmatprep.subr.mxu0 0.0
    %482 = vmatpush1.xpose.msra.mxu0 0.0
    %483 = vmatprep.subr.mxu0 0.0
    %484 = vmatpush1.xpose.msra.mxu0 0.0
    %485 = vmatprep.subr.mxu0 0.0
    %486 = vmatpush1.xpose.msra.mxu0 0.0
    %487 = vmatprep.subr.mxu0 0.0
    %488 = vmatpush1.xpose.msra.mxu0 0.0
    %489 = vmatprep.subr.mxu0 0.0
    %490 = vmatpush1.xpose.msra.mxu0 0.0
    %491 = vmatprep.subr.mxu0 0.0
    %492 = vmatpush1.xpose.msra.mxu0 %v459
    %493 = vmatprep.subr.mxu0 0.0
    %494 = vmatpush2.xpose.msra.mxu0 0.0
    %495 = vmatprep.subr.mxu0 0.0
    %496 = vmatpush2.xpose.msra.mxu0 0.0
    %497 = vmatprep.subr.mxu0 0.0
    %498 = vmatpush2.xpose.msra.mxu0 0.0
    %499 = vmatprep.subr.mxu0 0.0
    %500 = vmatpush2.xpose.msra.mxu0 0.0
    %501 = vmatprep.subr.mxu0 0.0
    %502 = vmatpush2.xpose.msra.mxu0 0.0
    %503 = vmatprep.subr.mxu0 0.0
    %504 = vmatpush2.xpose.msra.mxu0 0.0
    %505 = vmatprep.subr.mxu0 0.0
    %506 = vmatpush2.xpose.msra.mxu0 0.0
    %507 = vmatprep.subr.mxu0 0.0
    %508 = vmatpush2.xpose.msra.mxu0 0.0
    %509 = vmatprep.subr.mxu0 0.0
    %510 = vmatpush2.xpose.msra.mxu0 0.0
    %511 = vmatprep.subr.mxu0 0.0
    %512 = vmatpush2.xpose.msra.mxu0 0.0
    %513 = vmatprep.subr.mxu0 0.0
    %514 = vmatpush2.xpose.msra.mxu0 0.0
    %515 = vmatprep.subr.mxu0 0.0
    %516 = vmatpush2.xpose.msra.mxu0 0.0
    %517 = vmatprep.subr.mxu0 0.0
    %518 = vmatpush2.xpose.msra.mxu0 0.0
    %519 = vmatprep.subr.mxu0 0.0
    %520 = vmatpush2.xpose.msra.mxu0 0.0
    %521 = vmatprep.subr.mxu0 0.0
    %522 = vmatpush2.xpose.msra.mxu0 0.0
    %523 = vmatprep.subr.mxu0 0.0
    %524 = vmatpush2.xpose.msra.mxu0 0.0
    %525 = vmatprep.mubr.f32.mxu0 0.0
    %526 = vmatmul.mubr.f32.gmra.mxu0 %v457
    %v527 = vpop.f32.mrf.mxu0
    %v528 = vadd.f32 0.0, %v527
    %v529 = vpop.f32.mrf.mxu0
    %530 = vdwg.mxu0
    %531 = vrot.lane.b32.xlu0 %v145, 96
    %v532 = vpop.permute.xlu0 %531
    %v533 = vsel %vm152, %v145, 0
    %v535 = vsel %vm152, %v532, 0
    %537 = vmatprep.subr.mxu0 0.0
    %538 = vmatpush1.xpose.msra.mxu0 0.0
    %539 = vmatprep.subr.mxu0 0.0
    %540 = vmatpush1.xpose.msra.mxu0 0.0
    %541 = vmatprep.subr.mxu0 0.0
    %542 = vmatpush1.xpose.msra.mxu0 0.0
    %543 = vmatprep.subr.mxu0 0.0
    %544 = vmatpush1.xpose.msra.mxu0 0.0
    %545 = vmatprep.subr.mxu0 0.0
    %546 = vmatpush1.xpose.msra.mxu0 0.0
    %547 = vmatprep.subr.mxu0 0.0
    %548 = vmatpush1.xpose.msra.mxu0 0.0
    %549 = vmatprep.subr.mxu0 0.0
    %550 = vmatpush1.xpose.msra.mxu0 0.0
    %551 = vmatprep.subr.mxu0 0.0
    %552 = vmatpush1.xpose.msra.mxu0 0.0
    %553 = vmatprep.subr.mxu0 0.0
    %554 = vmatpush1.xpose.msra.mxu0 0.0
    %555 = vmatprep.subr.mxu0 0.0
    %556 = vmatpush1.xpose.msra.mxu0 0.0
    %557 = vmatprep.subr.mxu0 0.0
    %558 = vmatpush1.xpose.msra.mxu0 0.0
    %559 = vmatprep.subr.mxu0 0.0
    %560 = vmatpush1.xpose.msra.mxu0 0.0
    %561 = vmatprep.subr.mxu0 0.0
    %562 = vmatpush1.xpose.msra.mxu0 0.0
    %563 = vmatprep.subr.mxu0 0.0
    %564 = vmatpush1.xpose.msra.mxu0 0.0
    %565 = vmatprep.subr.mxu0 0.0
    %566 = vmatpush1.xpose.msra.mxu0 0.0
    %567 = vmatprep.subr.mxu0 0.0
    %568 = vmatpush1.xpose.msra.mxu0 %v535
    %569 = vmatprep.subr.mxu0 0.0
    %570 = vmatpush2.xpose.msra.mxu0 0.0
    %571 = vmatprep.subr.mxu0 0.0
    %572 = vmatpush2.xpose.msra.mxu0 0.0
    %573 = vmatprep.subr.mxu0 0.0
    %574 = vmatpush2.xpose.msra.mxu0 0.0
    %575 = vmatprep.subr.mxu0 0.0
    %576 = vmatpush2.xpose.msra.mxu0 0.0
    %577 = vmatprep.subr.mxu0 0.0
    %578 = vmatpush2.xpose.msra.mxu0 0.0
    %579 = vmatprep.subr.mxu0 0.0
    %580 = vmatpush2.xpose.msra.mxu0 0.0
    %581 = vmatprep.subr.mxu0 0.0
    %582 = vmatpush2.xpose.msra.mxu0 0.0
    %583 = vmatprep.subr.mxu0 0.0
    %584 = vmatpush2.xpose.msra.mxu0 0.0
    %585 = vmatprep.subr.mxu0 0.0
    %586 = vmatpush2.xpose.msra.mxu0 0.0
    %587 = vmatprep.subr.mxu0 0.0
    %588 = vmatpush2.xpose.msra.mxu0 0.0
    %589 = vmatprep.subr.mxu0 0.0
    %590 = vmatpush2.xpose.msra.mxu0 0.0
    %591 = vmatprep.subr.mxu0 0.0
    %592 = vmatpush2.xpose.msra.mxu0 0.0
    %593 = vmatprep.subr.mxu0 0.0
    %594 = vmatpush2.xpose.msra.mxu0 0.0
    %595 = vmatprep.subr.mxu0 0.0
    %596 = vmatpush2.xpose.msra.mxu0 0.0
    %597 = vmatprep.subr.mxu0 0.0
    %598 = vmatpush2.xpose.msra.mxu0 0.0
    %599 = vmatprep.subr.mxu0 0.0
    %600 = vmatpush2.xpose.msra.mxu0 0.0
    %601 = vmatprep.mubr.f32.mxu0 0.0
    %602 = vmatmul.mubr.f32.gmra.mxu0 %v533
    %v603 = vpop.f32.mrf.mxu0
    %v604 = vadd.f32 0.0, %v603
    %v605 = vpop.f32.mrf.mxu0
    %606 = vdwg.mxu0
    %607 = vrot.lane.b32.xlu0 %v147, 96
    %v608 = vpop.permute.xlu0 %607
    %v609 = vsel %vm152, %v147, 0
    %v611 = vsel %vm152, %v608, 0
    %613 = vmatprep.subr.mxu0 0.0
    %614 = vmatpush1.xpose.msra.mxu0 0.0
    %615 = vmatprep.subr.mxu0 0.0
    %616 = vmatpush1.xpose.msra.mxu0 0.0
    %617 = vmatprep.subr.mxu0 0.0
    %618 = vmatpush1.xpose.msra.mxu0 0.0
    %619 = vmatprep.subr.mxu0 0.0
    %620 = vmatpush1.xpose.msra.mxu0 0.0
    %621 = vmatprep.subr.mxu0 0.0
    %622 = vmatpush1.xpose.msra.mxu0 0.0
    %623 = vmatprep.subr.mxu0 0.0
    %624 = vmatpush1.xpose.msra.mxu0 0.0
    %625 = vmatprep.subr.mxu0 0.0
    %626 = vmatpush1.xpose.msra.mxu0 0.0
    %627 = vmatprep.subr.mxu0 0.0
    %628 = vmatpush1.xpose.msra.mxu0 0.0
    %629 = vmatprep.subr.mxu0 0.0
    %630 = vmatpush1.xpose.msra.mxu0 0.0
    %631 = vmatprep.subr.mxu0 0.0
    %632 = vmatpush1.xpose.msra.mxu0 0.0
    %633 = vmatprep.subr.mxu0 0.0
    %634 = vmatpush1.xpose.msra.mxu0 0.0
    %635 = vmatprep.subr.mxu0 0.0
    %636 = vmatpush1.xpose.msra.mxu0 0.0
    %637 = vmatprep.subr.mxu0 0.0
    %638 = vmatpush1.xpose.msra.mxu0 0.0
    %639 = vmatprep.subr.mxu0 0.0
    %640 = vmatpush1.xpose.msra.mxu0 0.0
    %641 = vmatprep.subr.mxu0 0.0
    %642 = vmatpush1.xpose.msra.mxu0 0.0
    %643 = vmatprep.subr.mxu0 0.0
    %644 = vmatpush1.xpose.msra.mxu0 %v611
    %645 = vmatprep.subr.mxu0 0.0
    %646 = vmatpush2.xpose.msra.mxu0 0.0
    %647 = vmatprep.subr.mxu0 0.0
    %648 = vmatpush2.xpose.msra.mxu0 0.0
    %649 = vmatprep.subr.mxu0 0.0
    %650 = vmatpush2.xpose.msra.mxu0 0.0
    %651 = vmatprep.subr.mxu0 0.0
    %652 = vmatpush2.xpose.msra.mxu0 0.0
    %653 = vmatprep.subr.mxu0 0.0
    %654 = vmatpush2.xpose.msra.mxu0 0.0
    %655 = vmatprep.subr.mxu0 0.0
    %656 = vmatpush2.xpose.msra.mxu0 0.0
    %657 = vmatprep.subr.mxu0 0.0
    %658 = vmatpush2.xpose.msra.mxu0 0.0
    %659 = vmatprep.subr.mxu0 0.0
    %660 = vmatpush2.xpose.msra.mxu0 0.0
    %661 = vmatprep.subr.mxu0 0.0
    %662 = vmatpush2.xpose.msra.mxu0 0.0
    %663 = vmatprep.subr.mxu0 0.0
    %664 = vmatpush2.xpose.msra.mxu0 0.0
    %665 = vmatprep.subr.mxu0 0.0
    %666 = vmatpush2.xpose.msra.mxu0 0.0
    %667 = vmatprep.subr.mxu0 0.0
    %668 = vmatpush2.xpose.msra.mxu0 0.0
    %669 = vmatprep.subr.mxu0 0.0
    %670 = vmatpush2.xpose.msra.mxu0 0.0
    %671 = vmatprep.subr.mxu0 0.0
    %672 = vmatpush2.xpose.msra.mxu0 0.0
    %673 = vmatprep.subr.mxu0 0.0
    %674 = vmatpush2.xpose.msra.mxu0 0.0
    %675 = vmatprep.subr.mxu0 0.0
    %676 = vmatpush2.xpose.msra.mxu0 0.0
    %677 = vmatprep.mubr.f32.mxu0 0.0
    %678 = vmatmul.mubr.f32.gmra.mxu0 %v609
    %v679 = vpop.f32.mrf.mxu0
    %v680 = vadd.f32 0.0, %v679
    %v681 = vpop.f32.mrf.mxu0
    %682 = vdwg.mxu0
    %683 = vrot.lane.b32.xlu0 %v149, 96
    %v684 = vpop.permute.xlu0 %683
    %v685 = vsel %vm152, %v149, 0
    %v687 = vsel %vm152, %v684, 0
    %689 = vmatprep.subr.mxu0 0.0
    %690 = vmatpush1.xpose.msra.mxu0 0.0
    %691 = vmatprep.subr.mxu0 0.0
    %692 = vmatpush1.xpose.msra.mxu0 0.0
    %693 = vmatprep.subr.mxu0 0.0
    %694 = vmatpush1.xpose.msra.mxu0 0.0
    %695 = vmatprep.subr.mxu0 0.0
    %696 = vmatpush1.xpose.msra.mxu0 0.0
    %697 = vmatprep.subr.mxu0 0.0
    %698 = vmatpush1.xpose.msra.mxu0 0.0
    %699 = vmatprep.subr.mxu0 0.0
    %700 = vmatpush1.xpose.msra.mxu0 0.0
    %701 = vmatprep.subr.mxu0 0.0
    %702 = vmatpush1.xpose.msra.mxu0 0.0
    %703 = vmatprep.subr.mxu0 0.0
    %704 = vmatpush1.xpose.msra.mxu0 0.0
    %705 = vmatprep.subr.mxu0 0.0
    %706 = vmatpush1.xpose.msra.mxu0 0.0
    %707 = vmatprep.subr.mxu0 0.0
    %708 = vmatpush1.xpose.msra.mxu0 0.0
    %709 = vmatprep.subr.mxu0 0.0
    %710 = vmatpush1.xpose.msra.mxu0 0.0
    %711 = vmatprep.subr.mxu0 0.0
    %712 = vmatpush1.xpose.msra.mxu0 0.0
    %713 = vmatprep.subr.mxu0 0.0
    %714 = vmatpush1.xpose.msra.mxu0 0.0
    %715 = vmatprep.subr.mxu0 0.0
    %716 = vmatpush1.xpose.msra.mxu0 0.0
    %717 = vmatprep.subr.mxu0 0.0
    %718 = vmatpush1.xpose.msra.mxu0 0.0
    %719 = vmatprep.subr.mxu0 0.0
    %720 = vmatpush1.xpose.msra.mxu0 %v687
    %721 = vmatprep.subr.mxu0 0.0
    %722 = vmatpush2.xpose.msra.mxu0 0.0
    %723 = vmatprep.subr.mxu0 0.0
    %724 = vmatpush2.xpose.msra.mxu0 0.0
    %725 = vmatprep.subr.mxu0 0.0
    %726 = vmatpush2.xpose.msra.mxu0 0.0
    %727 = vmatprep.subr.mxu0 0.0
    %728 = vmatpush2.xpose.msra.mxu0 0.0
    %729 = vmatprep.subr.mxu0 0.0
    %730 = vmatpush2.xpose.msra.mxu0 0.0
    %731 = vmatprep.subr.mxu0 0.0
    %732 = vmatpush2.xpose.msra.mxu0 0.0
    %733 = vmatprep.subr.mxu0 0.0
    %734 = vmatpush2.xpose.msra.mxu0 0.0
    %735 = vmatprep.subr.mxu0 0.0
    %736 = vmatpush2.xpose.msra.mxu0 0.0
    %737 = vmatprep.subr.mxu0 0.0
    %738 = vmatpush2.xpose.msra.mxu0 0.0
    %739 = vmatprep.subr.mxu0 0.0
    %740 = vmatpush2.xpose.msra.mxu0 0.0
    %741 = vmatprep.subr.mxu0 0.0
    %742 = vmatpush2.xpose.msra.mxu0 0.0
    %743 = vmatprep.subr.mxu0 0.0
    %744 = vmatpush2.xpose.msra.mxu0 0.0
    %745 = vmatprep.subr.mxu0 0.0
    %746 = vmatpush2.xpose.msra.mxu0 0.0
    %747 = vmatprep.subr.mxu0 0.0
    %748 = vmatpush2.xpose.msra.mxu0 0.0
    %749 = vmatprep.subr.mxu0 0.0
    %750 = vmatpush2.xpose.msra.mxu0 0.0
    %751 = vmatprep.subr.mxu0 0.0
    %752 = vmatpush2.xpose.msra.mxu0 0.0
    %753 = vmatprep.mubr.f32.mxu0 0.0
    %754 = vmatmul.mubr.f32.gmra.mxu0 %v685
    %v755 = vpop.f32.mrf.mxu0
    %v756 = vadd.f32 0.0, %v755
    %v757 = vpop.f32.mrf.mxu0
    %758 = vdwg.mxu0
    %v759 = vmul.f32 %v224, 0.35355338
    %v760 = vmul.f32 %v300, 0.35355338
    %v761 = vmul.f32 %v376, 0.35355338
    %v762 = vmul.f32 %v452, 0.35355338
    %v763 = vmul.f32 %v528, 0.35355338
    %v764 = vmul.f32 %v604, 0.35355338
    %v765 = vmul.f32 %v680, 0.35355338
    %v766 = vmul.f32 %v756, 0.35355338
    %v767 = vsel %vm152, %v759, -inf
    %768 = vmax.xlane.f32.xlu0 %v767
    %v769 = vpop.xlane.xlu0 %768
    %v770 = vsel %vm152, %v760, -inf
    %771 = vmax.xlane.f32.xlu0 %v770
    %v772 = vpop.xlane.xlu0 %771
    %v773 = vsel %vm152, %v761, -inf
    %774 = vmax.xlane.f32.xlu0 %v773
    %v775 = vpop.xlane.xlu0 %774
    %v776 = vsel %vm152, %v762, -inf
    %777 = vmax.xlane.f32.xlu0 %v776
    %v778 = vpop.xlane.xlu0 %777
    %v779 = vsel %vm152, %v763, -inf
    %780 = vmax.xlane.f32.xlu0 %v779
    %v781 = vpop.xlane.xlu0 %780
    %v782 = vsel %vm152, %v764, -inf
    %783 = vmax.xlane.f32.xlu0 %v782
    %v784 = vpop.xlane.xlu0 %783
    %v785 = vsel %vm152, %v765, -inf
    %786 = vmax.xlane.f32.xlu0 %v785
    %v787 = vpop.xlane.xlu0 %786
    %v788 = vsel %vm152, %v766, -inf
    %789 = vmax.xlane.f32.xlu0 %v788
    %v790 = vpop.xlane.xlu0 %789
    %v791 = vsub.f32 %v759, %v769
    %v792 = vsub.f32 %v760, %v772
    %v793 = vsub.f32 %v761, %v775
    %v794 = vsub.f32 %v762, %v778
    %v795 = vsub.f32 %v763, %v781
    %v796 = vsub.f32 %v764, %v784
    %v797 = vsub.f32 %v765, %v787
    %v798 = vsub.f32 %v766, %v790
    %v799 = vmul.f32 %v791, 1.442695
    %v800 = vpow.pop %v799
    %v801 = vmul.f32 %v792, 1.442695
    %v802 = vpow.pop %v801
    %v803 = vmul.f32 %v793, 1.442695
    %v804 = vpow.pop %v803
    %v805 = vmul.f32 %v794, 1.442695
    %v806 = vpow.pop %v805
    %v807 = vmul.f32 %v795, 1.442695
    %v808 = vpow.pop %v807
    %v809 = vmul.f32 %v796, 1.442695
    %v810 = vpow.pop %v809
    %v811 = vmul.f32 %v797, 1.442695
    %v812 = vpow.pop %v811
    %v813 = vmul.f32 %v798, 1.442695
    %v814 = vpow.pop %v813
    %v815 = vsel %vm152, %v800, 0.0
    %816 = vadd.xlane.f32.xlu0 %v815
    %v817 = vpop.xlane.xlu0 %816
    %v818 = vsel %vm152, %v802, 0.0
    %819 = vadd.xlane.f32.xlu0 %v818
    %v820 = vpop.xlane.xlu0 %819
    %v821 = vsel %vm152, %v804, 0.0
    %822 = vadd.xlane.f32.xlu0 %v821
    %v823 = vpop.xlane.xlu0 %822
    %v824 = vsel %vm152, %v806, 0.0
    %825 = vadd.xlane.f32.xlu0 %v824
    %v826 = vpop.xlane.xlu0 %825
    %v827 = vsel %vm152, %v808, 0.0
    %828 = vadd.xlane.f32.xlu0 %v827
    %v829 = vpop.xlane.xlu0 %828
    %v830 = vsel %vm152, %v810, 0.0
    %831 = vadd.xlane.f32.xlu0 %v830
    %v832 = vpop.xlane.xlu0 %831
    %v833 = vsel %vm152, %v812, 0.0
    %834 = vadd.xlane.f32.xlu0 %v833
    %v835 = vpop.xlane.xlu0 %834
    %v836 = vsel %vm152, %v814, 0.0
    %837 = vadd.xlane.f32.xlu0 %v836
    %v838 = vpop.xlane.xlu0 %837
    %v839 = vrcp.pop %v817
    %v840 = vrcp.pop %v820
    %v841 = vrcp.pop %v823
    %v842 = vrcp.pop %v826
    %v843 = vrcp.pop %v829
    %v844 = vrcp.pop %v832
    %v845 = vrcp.pop %v835
    %v846 = vrcp.pop %v838
    %v847 = vmul.f32 %v800, %v839
    %v848 = vmul.f32 %v802, %v840
    %v849 = vmul.f32 %v804, %v841
    %v850 = vmul.f32 %v806, %v842
    %v851 = vmul.f32 %v808, %v843
    %v852 = vmul.f32 %v810, %v844
    %v853 = vmul.f32 %v812, %v845
    %v854 = vmul.f32 %v814, %v846
    %855 = vrot.lane.b32.xlu0 %v128, 64
    %v856 = vpop.permute.xlu0 %855
    %v859 = vsel %vm152, %v847, 0
    %861 = vmatprep.subr.mxu0 0.0
    %862 = vmatpush1.msra.mxu0 0.0
    %863 = vmatprep.subr.mxu0 0.0
    %864 = vmatpush1.msra.mxu0 0.0
    %865 = vmatprep.subr.mxu0 0.0
    %866 = vmatpush1.msra.mxu0 0.0
    %867 = vmatprep.subr.mxu0 0.0
    %868 = vmatpush1.msra.mxu0 0.0
    %869 = vmatprep.subr.mxu0 0.0
    %870 = vmatpush1.msra.mxu0 0.0
    %871 = vmatprep.subr.mxu0 0.0
    %872 = vmatpush1.msra.mxu0 0.0
    %873 = vmatprep.subr.mxu0 0.0
    %874 = vmatpush1.msra.mxu0 0.0
    %875 = vmatprep.subr.mxu0 0.0
    %876 = vmatpush1.msra.mxu0 0.0
    %877 = vmatprep.subr.mxu0 0.0
    %878 = vmatpush1.msra.mxu0 0.0
    %879 = vmatprep.subr.mxu0 0.0
    %880 = vmatpush1.msra.mxu0 0.0
    %881 = vmatprep.subr.mxu0 0.0
    %882 = vmatpush1.msra.mxu0 0.0
    %883 = vmatprep.subr.mxu0 0.0
    %884 = vmatpush1.msra.mxu0 0.0
    %885 = vmatprep.subr.mxu0 0.0
    %886 = vmatpush1.msra.mxu0 0.0
    %887 = vmatprep.subr.mxu0 0.0
    %888 = vmatpush1.msra.mxu0 0.0
    %889 = vmatprep.subr.mxu0 0.0
    %890 = vmatpush1.msra.mxu0 0.0
    %891 = vmatprep.subr.mxu0 0.0
    %892 = vmatpush1.msra.mxu0 %v856
    %893 = vmatprep.subr.mxu0 0.0
    %894 = vmatpush2.msra.mxu0 0.0
    %895 = vmatprep.subr.mxu0 0.0
    %896 = vmatpush2.msra.mxu0 0.0
    %897 = vmatprep.subr.mxu0 0.0
    %898 = vmatpush2.msra.mxu0 0.0
    %899 = vmatprep.subr.mxu0 0.0
    %900 = vmatpush2.msra.mxu0 0.0
    %901 = vmatprep.subr.mxu0 0.0
    %902 = vmatpush2.msra.mxu0 0.0
    %903 = vmatprep.subr.mxu0 0.0
    %904 = vmatpush2.msra.mxu0 0.0
    %905 = vmatprep.subr.mxu0 0.0
    %906 = vmatpush2.msra.mxu0 0.0
    %907 = vmatprep.subr.mxu0 0.0
    %908 = vmatpush2.msra.mxu0 0.0
    %909 = vmatprep.subr.mxu0 0.0
    %910 = vmatpush2.msra.mxu0 0.0
    %911 = vmatprep.subr.mxu0 0.0
    %912 = vmatpush2.msra.mxu0 0.0
    %913 = vmatprep.subr.mxu0 0.0
    %914 = vmatpush2.msra.mxu0 0.0
    %915 = vmatprep.subr.mxu0 0.0
    %916 = vmatpush2.msra.mxu0 0.0
    %917 = vmatprep.subr.mxu0 0.0
    %918 = vmatpush2.msra.mxu0 0.0
    %919 = vmatprep.subr.mxu0 0.0
    %920 = vmatpush2.msra.mxu0 0.0
    %921 = vmatprep.subr.mxu0 0.0
    %922 = vmatpush2.msra.mxu0 0.0
    %923 = vmatprep.subr.mxu0 0.0
    %924 = vmatpush2.msra.mxu0 0.0
    %925 = vmatprep.mubr.f32.mxu0 0.0
    %926 = vmatmul.mubr.f32.gmra.mxu0 %v859
    %v927 = vpop.f32.mrf.mxu0
    %v928 = vadd.f32 0.0, %v927
    %v929 = vpop.f32.mrf.mxu0
    %930 = vdwg.mxu0
    %931 = vrot.lane.b32.xlu0 %v133, 64
    %v932 = vpop.permute.xlu0 %931
    %v935 = vsel %vm152, %v848, 0
    %937 = vmatprep.subr.mxu0 0.0
    %938 = vmatpush1.msra.mxu0 0.0
    %939 = vmatprep.subr.mxu0 0.0
    %940 = vmatpush1.msra.mxu0 0.0
    %941 = vmatprep.subr.mxu0 0.0
    %942 = vmatpush1.msra.mxu0 0.0
    %943 = vmatprep.subr.mxu0 0.0
    %944 = vmatpush1.msra.mxu0 0.0
    %945 = vmatprep.subr.mxu0 0.0
    %946 = vmatpush1.msra.mxu0 0.0
    %947 = vmatprep.subr.mxu0 0.0
    %948 = vmatpush1.msra.mxu0 0.0
    %949 = vmatprep.subr.mxu0 0.0
    %950 = vmatpush1.msra.mxu0 0.0
    %951 = vmatprep.subr.mxu0 0.0
    %952 = vmatpush1.msra.mxu0 0.0
    %953 = vmatprep.subr.mxu0 0.0
    %954 = vmatpush1.msra.mxu0 0.0
    %955 = vmatprep.subr.mxu0 0.0
    %956 = vmatpush1.msra.mxu0 0.0
    %957 = vmatprep.subr.mxu0 0.0
    %958 = vmatpush1.msra.mxu0 0.0
    %959 = vmatprep.subr.mxu0 0.0
    %960 = vmatpush1.msra.mxu0 0.0
    %961 = vmatprep.subr.mxu0 0.0
    %962 = vmatpush1.msra.mxu0 0.0
    %963 = vmatprep.subr.mxu0 0.0
    %964 = vmatpush1.msra.mxu0 0.0
    %965 = vmatprep.subr.mxu0 0.0
    %966 = vmatpush1.msra.mxu0 0.0
    %967 = vmatprep.subr.mxu0 0.0
    %968 = vmatpush1.msra.mxu0 %v932
    %969 = vmatprep.subr.mxu0 0.0
    %970 = vmatpush2.msra.mxu0 0.0
    %971 = vmatprep.subr.mxu0 0.0
    %972 = vmatpush2.msra.mxu0 0.0
    %973 = vmatprep.subr.mxu0 0.0
    %974 = vmatpush2.msra.mxu0 0.0
    %975 = vmatprep.subr.mxu0 0.0
    %976 = vmatpush2.msra.mxu0 0.0
    %977 = vmatprep.subr.mxu0 0.0
    %978 = vmatpush2.msra.mxu0 0.0
    %979 = vmatprep.subr.mxu0 0.0
    %980 = vmatpush2.msra.mxu0 0.0
    %981 = vmatprep.subr.mxu0 0.0
    %982 = vmatpush2.msra.mxu0 0.0
    %983 = vmatprep.subr.mxu0 0.0
    %984 = vmatpush2.msra.mxu0 0.0
    %985 = vmatprep.subr.mxu0 0.0
    %986 = vmatpush2.msra.mxu0 0.0
    %987 = vmatprep.subr.mxu0 0.0
    %988 = vmatpush2.msra.mxu0 0.0
    %989 = vmatprep.subr.mxu0 0.0
    %990 = vmatpush2.msra.mxu0 0.0
    %991 = vmatprep.subr.mxu0 0.0
    %992 = vmatpush2.msra.mxu0 0.0
    %993 = vmatprep.subr.mxu0 0.0
    %994 = vmatpush2.msra.mxu0 0.0
    %995 = vmatprep.subr.mxu0 0.0
    %996 = vmatpush2.msra.mxu0 0.0
    %997 = vmatprep.subr.mxu0 0.0
    %998 = vmatpush2.msra.mxu0 0.0
    %999 = vmatprep.subr.mxu0 0.0
    %1000 = vmatpush2.msra.mxu0 0.0
    %1001 = vmatprep.mubr.f32.mxu0 0.0
    %1002 = vmatmul.mubr.f32.gmra.mxu0 %v935
    %v1003 = vpop.f32.mrf.mxu0
    %v1004 = vadd.f32 0.0, %v1003
    %v1005 = vpop.f32.mrf.mxu0
    %1006 = vdwg.mxu0
    %1007 = vrot.lane.b32.xlu0 %v138, 64
    %v1008 = vpop.permute.xlu0 %1007
    %v1011 = vsel %vm152, %v849, 0
    %1013 = vmatprep.subr.mxu0 0.0
    %1014 = vmatpush1.msra.mxu0 0.0
    %1015 = vmatprep.subr.mxu0 0.0
    %1016 = vmatpush1.msra.mxu0 0.0
    %1017 = vmatprep.subr.mxu0 0.0
    %1018 = vmatpush1.msra.mxu0 0.0
    %1019 = vmatprep.subr.mxu0 0.0
    %1020 = vmatpush1.msra.mxu0 0.0
    %1021 = vmatprep.subr.mxu0 0.0
    %1022 = vmatpush1.msra.mxu0 0.0
    %1023 = vmatprep.subr.mxu0 0.0
    %1024 = vmatpush1.msra.mxu0 0.0
    %1025 = vmatprep.subr.mxu0 0.0
    %1026 = vmatpush1.msra.mxu0 0.0
    %1027 = vmatprep.subr.mxu0 0.0
    %1028 = vmatpush1.msra.mxu0 0.0
    %1029 = vmatprep.subr.mxu0 0.0
    %1030 = vmatpush1.msra.mxu0 0.0
    %1031 = vmatprep.subr.mxu0 0.0
    %1032 = vmatpush1.msra.mxu0 0.0
    %1033 = vmatprep.subr.mxu0 0.0
    %1034 = vmatpush1.msra.mxu0 0.0
    %1035 = vmatprep.subr.mxu0 0.0
    %1036 = vmatpush1.msra.mxu0 0.0
    %1037 = vmatprep.subr.mxu0 0.0
    %1038 = vmatpush1.msra.mxu0 0.0
    %1039 = vmatprep.subr.mxu0 0.0
    %1040 = vmatpush1.msra.mxu0 0.0
    %1041 = vmatprep.subr.mxu0 0.0
    %1042 = vmatpush1.msra.mxu0 0.0
    %1043 = vmatprep.subr.mxu0 0.0
    %1044 = vmatpush1.msra.mxu0 %v1008
    %1045 = vmatprep.subr.mxu0 0.0
    %1046 = vmatpush2.msra.mxu0 0.0
    %1047 = vmatprep.subr.mxu0 0.0
    %1048 = vmatpush2.msra.mxu0 0.0
    %1049 = vmatprep.subr.mxu0 0.0
    %1050 = vmatpush2.msra.mxu0 0.0
    %1051 = vmatprep.subr.mxu0 0.0
    %1052 = vmatpush2.msra.mxu0 0.0
    %1053 = vmatprep.subr.mxu0 0.0
    %1054 = vmatpush2.msra.mxu0 0.0
    %1055 = vmatprep.subr.mxu0 0.0
    %1056 = vmatpush2.msra.mxu0 0.0
    %1057 = vmatprep.subr.mxu0 0.0
    %1058 = vmatpush2.msra.mxu0 0.0
    %1059 = vmatprep.subr.mxu0 0.0
    %1060 = vmatpush2.msra.mxu0 0.0
    %1061 = vmatprep.subr.mxu0 0.0
    %1062 = vmatpush2.msra.mxu0 0.0
    %1063 = vmatprep.subr.mxu0 0.0
    %1064 = vmatpush2.msra.mxu0 0.0
    %1065 = vmatprep.subr.mxu0 0.0
    %1066 = vmatpush2.msra.mxu0 0.0
    %1067 = vmatprep.subr.mxu0 0.0
    %1068 = vmatpush2.msra.mxu0 0.0
    %1069 = vmatprep.subr.mxu0 0.0
    %1070 = vmatpush2.msra.mxu0 0.0
    %1071 = vmatprep.subr.mxu0 0.0
    %1072 = vmatpush2.msra.mxu0 0.0
    %1073 = vmatprep.subr.mxu0 0.0
    %1074 = vmatpush2.msra.mxu0 0.0
    %1075 = vmatprep.subr.mxu0 0.0
    %1076 = vmatpush2.msra.mxu0 0.0
    %1077 = vmatprep.mubr.f32.mxu0 0.0
    %1078 = vmatmul.mubr.f32.gmra.mxu0 %v1011
    %v1079 = vpop.f32.mrf.mxu0
    %v1080 = vadd.f32 0.0, %v1079
    %v1081 = vpop.f32.mrf.mxu0
    %1082 = vdwg.mxu0
    %1083 = vrot.lane.b32.xlu0 %v141, 64
    %v1084 = vpop.permute.xlu0 %1083
    %v1087 = vsel %vm152, %v850, 0
    %1089 = vmatprep.subr.mxu0 0.0
    %1090 = vmatpush1.msra.mxu0 0.0
    %1091 = vmatprep.subr.mxu0 0.0
    %1092 = vmatpush1.msra.mxu0 0.0
    %1093 = vmatprep.subr.mxu0 0.0
    %1094 = vmatpush1.msra.mxu0 0.0
    %1095 = vmatprep.subr.mxu0 0.0
    %1096 = vmatpush1.msra.mxu0 0.0
    %1097 = vmatprep.subr.mxu0 0.0
    %1098 = vmatpush1.msra.mxu0 0.0
    %1099 = vmatprep.subr.mxu0 0.0
    %1100 = vmatpush1.msra.mxu0 0.0
    %1101 = vmatprep.subr.mxu0 0.0
    %1102 = vmatpush1.msra.mxu0 0.0
    %1103 = vmatprep.subr.mxu0 0.0
    %1104 = vmatpush1.msra.mxu0 0.0
    %1105 = vmatprep.subr.mxu0 0.0
    %1106 = vmatpush1.msra.mxu0 0.0
    %1107 = vmatprep.subr.mxu0 0.0
    %1108 = vmatpush1.msra.mxu0 0.0
    %1109 = vmatprep.subr.mxu0 0.0
    %1110 = vmatpush1.msra.mxu0 0.0
    %1111 = vmatprep.subr.mxu0 0.0
    %1112 = vmatpush1.msra.mxu0 0.0
    %1113 = vmatprep.subr.mxu0 0.0
    %1114 = vmatpush1.msra.mxu0 0.0
    %1115 = vmatprep.subr.mxu0 0.0
    %1116 = vmatpush1.msra.mxu0 0.0
    %1117 = vmatprep.subr.mxu0 0.0
    %1118 = vmatpush1.msra.mxu0 0.0
    %1119 = vmatprep.subr.mxu0 0.0
    %1120 = vmatpush1.msra.mxu0 %v1084
    %1121 = vmatprep.subr.mxu0 0.0
    %1122 = vmatpush2.msra.mxu0 0.0
    %1123 = vmatprep.subr.mxu0 0.0
    %1124 = vmatpush2.msra.mxu0 0.0
    %1125 = vmatprep.subr.mxu0 0.0
    %1126 = vmatpush2.msra.mxu0 0.0
    %1127 = vmatprep.subr.mxu0 0.0
    %1128 = vmatpush2.msra.mxu0 0.0
    %1129 = vmatprep.subr.mxu0 0.0
    %1130 = vmatpush2.msra.mxu0 0.0
    %1131 = vmatprep.subr.mxu0 0.0
    %1132 = vmatpush2.msra.mxu0 0.0
    %1133 = vmatprep.subr.mxu0 0.0
    %1134 = vmatpush2.msra.mxu0 0.0
    %1135 = vmatprep.subr.mxu0 0.0
    %1136 = vmatpush2.msra.mxu0 0.0
    %1137 = vmatprep.subr.mxu0 0.0
    %1138 = vmatpush2.msra.mxu0 0.0
    %1139 = vmatprep.subr.mxu0 0.0
    %1140 = vmatpush2.msra.mxu0 0.0
    %1141 = vmatprep.subr.mxu0 0.0
    %1142 = vmatpush2.msra.mxu0 0.0
    %1143 = vmatprep.subr.mxu0 0.0
    %1144 = vmatpush2.msra.mxu0 0.0
    %1145 = vmatprep.subr.mxu0 0.0
    %1146 = vmatpush2.msra.mxu0 0.0
    %1147 = vmatprep.subr.mxu0 0.0
    %1148 = vmatpush2.msra.mxu0 0.0
    %1149 = vmatprep.subr.mxu0 0.0
    %1150 = vmatpush2.msra.mxu0 0.0
    %1151 = vmatprep.subr.mxu0 0.0
    %1152 = vmatpush2.msra.mxu0 0.0
    %1153 = vmatprep.mubr.f32.mxu0 0.0
    %1154 = vmatmul.mubr.f32.gmra.mxu0 %v1087
    %v1155 = vpop.f32.mrf.mxu0
    %v1156 = vadd.f32 0.0, %v1155
    %v1157 = vpop.f32.mrf.mxu0
    %1158 = vdwg.mxu0
    %1159 = vrot.lane.b32.xlu0 %v143, 64
    %v1160 = vpop.permute.xlu0 %1159
    %v1163 = vsel %vm152, %v851, 0
    %1165 = vmatprep.subr.mxu0 0.0
    %1166 = vmatpush1.msra.mxu0 0.0
    %1167 = vmatprep.subr.mxu0 0.0
    %1168 = vmatpush1.msra.mxu0 0.0
    %1169 = vmatprep.subr.mxu0 0.0
    %1170 = vmatpush1.msra.mxu0 0.0
    %1171 = vmatprep.subr.mxu0 0.0
    %1172 = vmatpush1.msra.mxu0 0.0
    %1173 = vmatprep.subr.mxu0 0.0
    %1174 = vmatpush1.msra.mxu0 0.0
    %1175 = vmatprep.subr.mxu0 0.0
    %1176 = vmatpush1.msra.mxu0 0.0
    %1177 = vmatprep.subr.mxu0 0.0
    %1178 = vmatpush1.msra.mxu0 0.0
    %1179 = vmatprep.subr.mxu0 0.0
    %1180 = vmatpush1.msra.mxu0 0.0
    %1181 = vmatprep.subr.mxu0 0.0
    %1182 = vmatpush1.msra.mxu0 0.0
    %1183 = vmatprep.subr.mxu0 0.0
    %1184 = vmatpush1.msra.mxu0 0.0
    %1185 = vmatprep.subr.mxu0 0.0
    %1186 = vmatpush1.msra.mxu0 0.0
    %1187 = vmatprep.subr.mxu0 0.0
    %1188 = vmatpush1.msra.mxu0 0.0
    %1189 = vmatprep.subr.mxu0 0.0
    %1190 = vmatpush1.msra.mxu0 0.0
    %1191 = vmatprep.subr.mxu0 0.0
    %1192 = vmatpush1.msra.mxu0 0.0
    %1193 = vmatprep.subr.mxu0 0.0
    %1194 = vmatpush1.msra.mxu0 0.0
    %1195 = vmatprep.subr.mxu0 0.0
    %1196 = vmatpush1.msra.mxu0 %v1160
    %1197 = vmatprep.subr.mxu0 0.0
    %1198 = vmatpush2.msra.mxu0 0.0
    %1199 = vmatprep.subr.mxu0 0.0
    %1200 = vmatpush2.msra.mxu0 0.0
    %1201 = vmatprep.subr.mxu0 0.0
    %1202 = vmatpush2.msra.mxu0 0.0
    %1203 = vmatprep.subr.mxu0 0.0
    %1204 = vmatpush2.msra.mxu0 0.0
    %1205 = vmatprep.subr.mxu0 0.0
    %1206 = vmatpush2.msra.mxu0 0.0
    %1207 = vmatprep.subr.mxu0 0.0
    %1208 = vmatpush2.msra.mxu0 0.0
    %1209 = vmatprep.subr.mxu0 0.0
    %1210 = vmatpush2.msra.mxu0 0.0
    %1211 = vmatprep.subr.mxu0 0.0
    %1212 = vmatpush2.msra.mxu0 0.0
    %1213 = vmatprep.subr.mxu0 0.0
    %1214 = vmatpush2.msra.mxu0 0.0
    %1215 = vmatprep.subr.mxu0 0.0
    %1216 = vmatpush2.msra.mxu0 0.0
    %1217 = vmatprep.subr.mxu0 0.0
    %1218 = vmatpush2.msra.mxu0 0.0
    %1219 = vmatprep.subr.mxu0 0.0
    %1220 = vmatpush2.msra.mxu0 0.0
    %1221 = vmatprep.subr.mxu0 0.0
    %1222 = vmatpush2.msra.mxu0 0.0
    %1223 = vmatprep.subr.mxu0 0.0
    %1224 = vmatpush2.msra.mxu0 0.0
    %1225 = vmatprep.subr.mxu0 0.0
    %1226 = vmatpush2.msra.mxu0 0.0
    %1227 = vmatprep.subr.mxu0 0.0
    %1228 = vmatpush2.msra.mxu0 0.0
    %1229 = vmatprep.mubr.f32.mxu0 0.0
    %1230 = vmatmul.mubr.f32.gmra.mxu0 %v1163
    %v1231 = vpop.f32.mrf.mxu0
    %v1232 = vadd.f32 0.0, %v1231
    %v1233 = vpop.f32.mrf.mxu0
    %1234 = vdwg.mxu0
    %1235 = vrot.lane.b32.xlu0 %v145, 64
    %v1236 = vpop.permute.xlu0 %1235
    %v1239 = vsel %vm152, %v852, 0
    %1241 = vmatprep.subr.mxu0 0.0
    %1242 = vmatpush1.msra.mxu0 0.0
    %1243 = vmatprep.subr.mxu0 0.0
    %1244 = vmatpush1.msra.mxu0 0.0
    %1245 = vmatprep.subr.mxu0 0.0
    %1246 = vmatpush1.msra.mxu0 0.0
    %1247 = vmatprep.subr.mxu0 0.0
    %1248 = vmatpush1.msra.mxu0 0.0
    %1249 = vmatprep.subr.mxu0 0.0
    %1250 = vmatpush1.msra.mxu0 0.0
    %1251 = vmatprep.subr.mxu0 0.0
    %1252 = vmatpush1.msra.mxu0 0.0
    %1253 = vmatprep.subr.mxu0 0.0
    %1254 = vmatpush1.msra.mxu0 0.0
    %1255 = vmatprep.subr.mxu0 0.0
    %1256 = vmatpush1.msra.mxu0 0.0
    %1257 = vmatprep.subr.mxu0 0.0
    %1258 = vmatpush1.msra.mxu0 0.0
    %1259 = vmatprep.subr.mxu0 0.0
    %1260 = vmatpush1.msra.mxu0 0.0
    %1261 = vmatprep.subr.mxu0 0.0
    %1262 = vmatpush1.msra.mxu0 0.0
    %1263 = vmatprep.subr.mxu0 0.0
    %1264 = vmatpush1.msra.mxu0 0.0
    %1265 = vmatprep.subr.mxu0 0.0
    %1266 = vmatpush1.msra.mxu0 0.0
    %1267 = vmatprep.subr.mxu0 0.0
    %1268 = vmatpush1.msra.mxu0 0.0
    %1269 = vmatprep.subr.mxu0 0.0
    %1270 = vmatpush1.msra.mxu0 0.0
    %1271 = vmatprep.subr.mxu0 0.0
    %1272 = vmatpush1.msra.mxu0 %v1236
    %1273 = vmatprep.subr.mxu0 0.0
    %1274 = vmatpush2.msra.mxu0 0.0
    %1275 = vmatprep.subr.mxu0 0.0
    %1276 = vmatpush2.msra.mxu0 0.0
    %1277 = vmatprep.subr.mxu0 0.0
    %1278 = vmatpush2.msra.mxu0 0.0
    %1279 = vmatprep.subr.mxu0 0.0
    %1280 = vmatpush2.msra.mxu0 0.0
    %1281 = vmatprep.subr.mxu0 0.0
    %1282 = vmatpush2.msra.mxu0 0.0
    %1283 = vmatprep.subr.mxu0 0.0
    %1284 = vmatpush2.msra.mxu0 0.0
    %1285 = vmatprep.subr.mxu0 0.0
    %1286 = vmatpush2.msra.mxu0 0.0
    %1287 = vmatprep.subr.mxu0 0.0
    %1288 = vmatpush2.msra.mxu0 0.0
    %1289 = vmatprep.subr.mxu0 0.0
    %1290 = vmatpush2.msra.mxu0 0.0
    %1291 = vmatprep.subr.mxu0 0.0
    %1292 = vmatpush2.msra.mxu0 0.0
    %1293 = vmatprep.subr.mxu0 0.0
    %1294 = vmatpush2.msra.mxu0 0.0
    %1295 = vmatprep.subr.mxu0 0.0
    %1296 = vmatpush2.msra.mxu0 0.0
    %1297 = vmatprep.subr.mxu0 0.0
    %1298 = vmatpush2.msra.mxu0 0.0
    %1299 = vmatprep.subr.mxu0 0.0
    %1300 = vmatpush2.msra.mxu0 0.0
    %1301 = vmatprep.subr.mxu0 0.0
    %1302 = vmatpush2.msra.mxu0 0.0
    %1303 = vmatprep.subr.mxu0 0.0
    %1304 = vmatpush2.msra.mxu0 0.0
    %1305 = vmatprep.mubr.f32.mxu0 0.0
    %1306 = vmatmul.mubr.f32.gmra.mxu0 %v1239
    %v1307 = vpop.f32.mrf.mxu0
    %v1308 = vadd.f32 0.0, %v1307
    %v1309 = vpop.f32.mrf.mxu0
    %1310 = vdwg.mxu0
    %1311 = vrot.lane.b32.xlu0 %v147, 64
    %v1312 = vpop.permute.xlu0 %1311
    %v1315 = vsel %vm152, %v853, 0
    %1317 = vmatprep.subr.mxu0 0.0
    %1318 = vmatpush1.msra.mxu0 0.0
    %1319 = vmatprep.subr.mxu0 0.0
    %1320 = vmatpush1.msra.mxu0 0.0
    %1321 = vmatprep.subr.mxu0 0.0
    %1322 = vmatpush1.msra.mxu0 0.0
    %1323 = vmatprep.subr.mxu0 0.0
    %1324 = vmatpush1.msra.mxu0 0.0
    %1325 = vmatprep.subr.mxu0 0.0
    %1326 = vmatpush1.msra.mxu0 0.0
    %1327 = vmatprep.subr.mxu0 0.0
    %1328 = vmatpush1.msra.mxu0 0.0
    %1329 = vmatprep.subr.mxu0 0.0
    %1330 = vmatpush1.msra.mxu0 0.0
    %1331 = vmatprep.subr.mxu0 0.0
    %1332 = vmatpush1.msra.mxu0 0.0
    %1333 = vmatprep.subr.mxu0 0.0
    %1334 = vmatpush1.msra.mxu0 0.0
    %1335 = vmatprep.subr.mxu0 0.0
    %1336 = vmatpush1.msra.mxu0 0.0
    %1337 = vmatprep.subr.mxu0 0.0
    %1338 = vmatpush1.msra.mxu0 0.0
    %1339 = vmatprep.subr.mxu0 0.0
    %1340 = vmatpush1.msra.mxu0 0.0
    %1341 = vmatprep.subr.mxu0 0.0
    %1342 = vmatpush1.msra.mxu0 0.0
    %1343 = vmatprep.subr.mxu0 0.0
    %1344 = vmatpush1.msra.mxu0 0.0
    %1345 = vmatprep.subr.mxu0 0.0
    %1346 = vmatpush1.msra.mxu0 0.0
    %1347 = vmatprep.subr.mxu0 0.0
    %1348 = vmatpush1.msra.mxu0 %v1312
    %1349 = vmatprep.subr.mxu0 0.0
    %1350 = vmatpush2.msra.mxu0 0.0
    %1351 = vmatprep.subr.mxu0 0.0
    %1352 = vmatpush2.msra.mxu0 0.0
    %1353 = vmatprep.subr.mxu0 0.0
    %1354 = vmatpush2.msra.mxu0 0.0
    %1355 = vmatprep.subr.mxu0 0.0
    %1356 = vmatpush2.msra.mxu0 0.0
    %1357 = vmatprep.subr.mxu0 0.0
    %1358 = vmatpush2.msra.mxu0 0.0
    %1359 = vmatprep.subr.mxu0 0.0
    %1360 = vmatpush2.msra.mxu0 0.0
    %1361 = vmatprep.subr.mxu0 0.0
    %1362 = vmatpush2.msra.mxu0 0.0
    %1363 = vmatprep.subr.mxu0 0.0
    %1364 = vmatpush2.msra.mxu0 0.0
    %1365 = vmatprep.subr.mxu0 0.0
    %1366 = vmatpush2.msra.mxu0 0.0
    %1367 = vmatprep.subr.mxu0 0.0
    %1368 = vmatpush2.msra.mxu0 0.0
    %1369 = vmatprep.subr.mxu0 0.0
    %1370 = vmatpush2.msra.mxu0 0.0
    %1371 = vmatprep.subr.mxu0 0.0
    %1372 = vmatpush2.msra.mxu0 0.0
    %1373 = vmatprep.subr.mxu0 0.0
    %1374 = vmatpush2.msra.mxu0 0.0
    %1375 = vmatprep.subr.mxu0 0.0
    %1376 = vmatpush2.msra.mxu0 0.0
    %1377 = vmatprep.subr.mxu0 0.0
    %1378 = vmatpush2.msra.mxu0 0.0
    %1379 = vmatprep.subr.mxu0 0.0
    %1380 = vmatpush2.msra.mxu0 0.0
    %1381 = vmatprep.mubr.f32.mxu0 0.0
    %1382 = vmatmul.mubr.f32.gmra.mxu0 %v1315
    %v1383 = vpop.f32.mrf.mxu0
    %v1384 = vadd.f32 0.0, %v1383
    %v1385 = vpop.f32.mrf.mxu0
    %1386 = vdwg.mxu0
    %1387 = vrot.lane.b32.xlu0 %v149, 64
    %v1388 = vpop.permute.xlu0 %1387
    %v1391 = vsel %vm152, %v854, 0
    %1393 = vmatprep.subr.mxu0 0.0
    %1394 = vmatpush1.msra.mxu0 0.0
    %1395 = vmatprep.subr.mxu0 0.0
    %1396 = vmatpush1.msra.mxu0 0.0
    %1397 = vmatprep.subr.mxu0 0.0
    %1398 = vmatpush1.msra.mxu0 0.0
    %1399 = vmatprep.subr.mxu0 0.0
    %1400 = vmatpush1.msra.mxu0 0.0
    %1401 = vmatprep.subr.mxu0 0.0
    %1402 = vmatpush1.msra.mxu0 0.0
    %1403 = vmatprep.subr.mxu0 0.0
    %1404 = vmatpush1.msra.mxu0 0.0
    %1405 = vmatprep.subr.mxu0 0.0
    %1406 = vmatpush1.msra.mxu0 0.0
    %1407 = vmatprep.subr.mxu0 0.0
    %1408 = vmatpush1.msra.mxu0 0.0
    %1409 = vmatprep.subr.mxu0 0.0
    %1410 = vmatpush1.msra.mxu0 0.0
    %1411 = vmatprep.subr.mxu0 0.0
    %1412 = vmatpush1.msra.mxu0 0.0
    %1413 = vmatprep.subr.mxu0 0.0
    %1414 = vmatpush1.msra.mxu0 0.0
    %1415 = vmatprep.subr.mxu0 0.0
    %1416 = vmatpush1.msra.mxu0 0.0
    %1417 = vmatprep.subr.mxu0 0.0
    %1418 = vmatpush1.msra.mxu0 0.0
    %1419 = vmatprep.subr.mxu0 0.0
    %1420 = vmatpush1.msra.mxu0 0.0
    %1421 = vmatprep.subr.mxu0 0.0
    %1422 = vmatpush1.msra.mxu0 0.0
    %1423 = vmatprep.subr.mxu0 0.0
    %1424 = vmatpush1.msra.mxu0 %v1388
    %1425 = vmatprep.subr.mxu0 0.0
    %1426 = vmatpush2.msra.mxu0 0.0
    %1427 = vmatprep.subr.mxu0 0.0
    %1428 = vmatpush2.msra.mxu0 0.0
    %1429 = vmatprep.subr.mxu0 0.0
    %1430 = vmatpush2.msra.mxu0 0.0
    %1431 = vmatprep.subr.mxu0 0.0
    %1432 = vmatpush2.msra.mxu0 0.0
    %1433 = vmatprep.subr.mxu0 0.0
    %1434 = vmatpush2.msra.mxu0 0.0
    %1435 = vmatprep.subr.mxu0 0.0
    %1436 = vmatpush2.msra.mxu0 0.0
    %1437 = vmatprep.subr.mxu0 0.0
    %1438 = vmatpush2.msra.mxu0 0.0
    %1439 = vmatprep.subr.mxu0 0.0
    %1440 = vmatpush2.msra.mxu0 0.0
    %1441 = vmatprep.subr.mxu0 0.0
    %1442 = vmatpush2.msra.mxu0 0.0
    %1443 = vmatprep.subr.mxu0 0.0
    %1444 = vmatpush2.msra.mxu0 0.0
    %1445 = vmatprep.subr.mxu0 0.0
    %1446 = vmatpush2.msra.mxu0 0.0
    %1447 = vmatprep.subr.mxu0 0.0
    %1448 = vmatpush2.msra.mxu0 0.0
    %1449 = vmatprep.subr.mxu0 0.0
    %1450 = vmatpush2.msra.mxu0 0.0
    %1451 = vmatprep.subr.mxu0 0.0
    %1452 = vmatpush2.msra.mxu0 0.0
    %1453 = vmatprep.subr.mxu0 0.0
    %1454 = vmatpush2.msra.mxu0 0.0
    %1455 = vmatprep.subr.mxu0 0.0
    %1456 = vmatpush2.msra.mxu0 0.0
    %1457 = vmatprep.mubr.f32.mxu0 0.0
    %1458 = vmatmul.mubr.f32.gmra.mxu0 %v1391
    %v1459 = vpop.f32.mrf.mxu0
    %v1460 = vadd.f32 0.0, %v1459
    %v1461 = vpop.f32.mrf.mxu0
    %1462 = vdwg.mxu0
    %1464 = vrot.lane.b32.xlu0 %v1080, 8
    %v1465 = vpop.permute.xlu0 %1464
    %1468 = vrot.lane.b32.xlu0 %v1232, 16
    %v1469 = vpop.permute.xlu0 %1468
    %1472 = vrot.lane.b32.xlu0 %v1384, 24
    %v1473 = vpop.permute.xlu0 %1472
    %v1475 = vsel %vm152, %v928, %v1465
    %vm1476 = vcmask 130048
    %v1477 = vsel %vm1476, %v1475, %v1469
    %vm1478 = vcmask 195584
    %v1479 = vsel %vm1478, %v1477, %v1473
    %1481 = vrot.lane.b32.xlu0 %v1156, 8
    %v1482 = vpop.permute.xlu0 %1481
    %1485 = vrot.lane.b32.xlu0 %v1308, 16
    %v1486 = vpop.permute.xlu0 %1485
    %1489 = vrot.lane.b32.xlu0 %v1460, 24
    %v1490 = vpop.permute.xlu0 %1489
    %v1492 = vsel %vm152, %v1004, %v1482
    %v1493 = vsel %vm1476, %v1492, %v1486
    %v1494 = vsel %vm1478, %v1493, %v1490
    %v1495 = vld [vmem:[#allocation5] sm:$0xff]
    %v1496 = vld [vmem:[#allocation5 + $0x8] sm:$0xff]
    %v1497 = vld [vmem:[#allocation5 + $0x10] sm:$0xff]
    %v1498 = vld [vmem:[#allocation5 + $0x18] sm:$0xff]
    %v1499 = vld [vmem:[%s2] sm:$0x1]
    %v1500 = vlaneseq
    %v1501 = vshrl.u32 %v1500, 7
    %v1502 = vsub.s32 0, %v1501
    %v1503 = vrot.slane %v1499, %v1502
    %1508 = vrot.lane.b32.xlu0 %v1495, 32
    %v1509 = vpop.permute.xlu0 %1508
    %1510 = vrot.lane.b32.xlu0 %v1496, 32
    %v1511 = vpop.permute.xlu0 %1510
    %1512 = vrot.lane.b32.xlu0 %v1497, 32
    %v1513 = vpop.permute.xlu0 %1512
    %1514 = vrot.lane.b32.xlu0 %v1498, 32
    %v1515 = vpop.permute.xlu0 %1514
    %1521 = vrot.lane.b32.xlu0 %v1503, 32
    %v1522 = vpop.permute.xlu0 %1521
    %v1525 = vsel %vm54, %v1479, 0
    %v1528 = vsel %vm54, %v1494, 0
    %1530 = vmatprep.subr.mxu0 0.0
    %1531 = vmatpush1.msra.mxu0 0.0
    %1532 = vmatprep.subr.mxu0 0.0
    %1533 = vmatpush1.msra.mxu0 0.0
    %1534 = vmatprep.subr.mxu0 0.0
    %1535 = vmatpush1.msra.mxu0 0.0
    %1536 = vmatprep.subr.mxu0 0.0
    %1537 = vmatpush1.msra.mxu0 0.0
    %1538 = vmatprep.subr.mxu0 0.0
    %1539 = vmatpush1.msra.mxu0 0.0
    %1540 = vmatprep.subr.mxu0 0.0
    %1541 = vmatpush1.msra.mxu0 0.0
    %1542 = vmatprep.subr.mxu0 0.0
    %1543 = vmatpush1.msra.mxu0 0.0
    %1544 = vmatprep.subr.mxu0 0.0
    %1545 = vmatpush1.msra.mxu0 0.0
    %1546 = vmatprep.subr.mxu0 0.0
    %1547 = vmatpush1.msra.mxu0 0.0
    %1548 = vmatprep.subr.mxu0 0.0
    %1549 = vmatpush1.msra.mxu0 0.0
    %1550 = vmatprep.subr.mxu0 0.0
    %1551 = vmatpush1.msra.mxu0 0.0
    %1552 = vmatprep.subr.mxu0 0.0
    %1553 = vmatpush1.msra.mxu0 0.0
    %1554 = vmatprep.subr.mxu0 0.0
    %1555 = vmatpush1.msra.mxu0 %v1515
    %1556 = vmatprep.subr.mxu0 0.0
    %1557 = vmatpush1.msra.mxu0 %v1513
    %1558 = vmatprep.subr.mxu0 0.0
    %1559 = vmatpush1.msra.mxu0 %v1511
    %1560 = vmatprep.subr.mxu0 0.0
    %1561 = vmatpush1.msra.mxu0 %v1509
    %1562 = vmatprep.subr.mxu0 0.0
    %1563 = vmatpush2.msra.mxu0 0.0
    %1564 = vmatprep.subr.mxu0 0.0
    %1565 = vmatpush2.msra.mxu0 0.0
    %1566 = vmatprep.subr.mxu0 0.0
    %1567 = vmatpush2.msra.mxu0 0.0
    %1568 = vmatprep.subr.mxu0 0.0
    %1569 = vmatpush2.msra.mxu0 0.0
    %1570 = vmatprep.subr.mxu0 0.0
    %1571 = vmatpush2.msra.mxu0 0.0
    %1572 = vmatprep.subr.mxu0 0.0
    %1573 = vmatpush2.msra.mxu0 0.0
    %1574 = vmatprep.subr.mxu0 0.0
    %1575 = vmatpush2.msra.mxu0 0.0
    %1576 = vmatprep.subr.mxu0 0.0
    %1577 = vmatpush2.msra.mxu0 0.0
    %1578 = vmatprep.subr.mxu0 0.0
    %1579 = vmatpush2.msra.mxu0 0.0
    %1580 = vmatprep.subr.mxu0 0.0
    %1581 = vmatpush2.msra.mxu0 0.0
    %1582 = vmatprep.subr.mxu0 0.0
    %1583 = vmatpush2.msra.mxu0 0.0
    %1584 = vmatprep.subr.mxu0 0.0
    %1585 = vmatpush2.msra.mxu0 0.0
    %1586 = vmatprep.subr.mxu0 0.0
    %1587 = vmatpush2.msra.mxu0 0.0
    %1588 = vmatprep.subr.mxu0 0.0
    %1589 = vmatpush2.msra.mxu0 0.0
    %1590 = vmatprep.subr.mxu0 0.0
    %1591 = vmatpush2.msra.mxu0 0.0
    %1592 = vmatprep.subr.mxu0 0.0
    %1593 = vmatpush2.msra.mxu0 0.0
    %1594 = vmatprep.mubr.f32.mxu0 0.0
    %1595 = vmatmul.mubr.f32.gmra.mxu0 %v1525
    %v1596 = vpop.f32.mrf.mxu0
    %v1597 = vadd.f32 %v1522, %v1596
    %v1598 = vpop.f32.mrf.mxu0
    %1599 = vmatprep.mubr.f32.mxu0 0.0
    %1600 = vmatmul.mubr.f32.gmra.mxu0 %v1528
    %v1601 = vpop.f32.mrf.mxu0
    %v1602 = vadd.f32 %v1522, %v1601
    %v1603 = vpop.f32.mrf.mxu0
    %1604 = vdwg.mxu0
    %v1605 = vadd.f32 %v1597, %v43
    %v1606 = vadd.f32 %v1602, %v44
    %v1607 = vsel %vm54, %v1605, 0.0
    %1608 = vadd.xlane.f32.xlu0 %v1607
    %v1609 = vpop.xlane.xlu0 %1608
    %v1610 = vsel %vm54, %v1606, 0.0
    %1611 = vadd.xlane.f32.xlu0 %v1610
    %v1612 = vpop.xlane.xlu0 %1611
    %v1613 = vrcp.pop 32.0
    %v1614 = vmul.f32 %v1609, %v1613
    %v1615 = vmul.f32 %v1612, %v1613
    %v1616 = vmul.f32 %v1605, %v1605
    %v1617 = vmul.f32 %v1606, %v1606
    %v1618 = vsel %vm54, %v1616, 0.0
    %1619 = vadd.xlane.f32.xlu0 %v1618
    %v1620 = vpop.xlane.xlu0 %1619
    %v1621 = vsel %vm54, %v1617, 0.0
    %1622 = vadd.xlane.f32.xlu0 %v1621
    %v1623 = vpop.xlane.xlu0 %1622
    %v1624 = vmul.f32 %v1620, %v1613
    %v1625 = vmul.f32 %v1623, %v1613
    %v1626 = vmul.f32 %v1614, %v1614
    %v1627 = vmul.f32 %v1615, %v1615
    %v1628 = vsub.f32 %v1624, %v1626
    %v1629 = vsub.f32 %v1625, %v1627
    %v1630 = vsub.f32 %v1605, %v1614
    %v1631 = vsub.f32 %v1606, %v1615
    %v1632 = vadd.f32 %v1628, 1e-12
    %v1633 = vadd.f32 %v1629, 1e-12
    %v1634 = vrsqrt.pop %v1632
    %v1635 = vrsqrt.pop %v1633
    %v1636 = vmul.f32 %v1630, %v1634
    %v1637 = vmul.f32 %v1631, %v1635
    %v1638 = vld [vmem:[%s2 + $0x1] sm:$0x1]
    %v1639 = vlaneseq
    %v1640 = vshrl.u32 %v1639, 7
    %v1641 = vsub.s32 0, %v1640
    %v1642 = vrot.slane %v1638, %v1641
    %v1643 = vmul.f32 %v1636, %v1642
    %v1644 = vmul.f32 %v1637, %v1642
    %1646 = vrot.lane.b32.xlu0 %v1642, 96
    %v1647 = vpop.permute.xlu0 %1646
    %v1649 = vadd.f32 %v1643, %v1647
    %v1650 = vadd.f32 %v1644, %v1647
    %1651 = vst.msk [vmem:[#allocation7] sm:$0xff] %vm54, %v1649
    %1652 = vst.msk [vmem:[#allocation7 + $0x8] sm:$0xff] %vm54, %v1650
    // Predicated region
    $region22: #{tpu_custom_call.1} parent=1 // pred_check
      _
    $region23: #{tpu_custom_call.1} parent=1 // pred_check_branch
      %1654 = sbr.rel (0) target = $region25
    $region24: #{tpu_custom_call.1} parent=1 // pred_region
      %s1656 = ssub.s32 256, 256
      %1657 = vsyncadd [#allocation4], %s1656
      %s1658 = sshll.u32 [#allocation7], 4
      %s1659 = int_to_ptr.vmem [resolvable:$true] %s1658
      %1664 = dma.vmem_to_hbm [thread:$0]  %s1659, 256, %s3, [#allocation4], 128, 128, 8
    $region25: #{tpu_custom_call.1} parent=1 // pred_fallthru
      _
    // Predicated region
    $region26: #{tpu_custom_call.1} parent=1 // pred_check
      _
    $region27: #{tpu_custom_call.1} parent=1 // pred_check_branch
      %1666 = sbr.rel (0) target = $region29
    $region28: #{tpu_custom_call.1} parent=1 // pred_region
      %1667 = dma.done [#allocation4], 256
    $region29: #{tpu_custom_call.1} parent=1 // pred_fallthru
      _
    %1668 = vsyncpa [#allocation3], 1
    %1669 = vsyncpa [#allocation6], 1
    %1670 = vsyncpa [#allocation4], 1

</llo_original>
